<compile_context>
chip_gen: v6e
topology: v6e:2x2x1
jax: 0.10.0
libtpu: 0.0.40
codegen_flags: <defaults>
</compile_context>

<pallas_src>
import functools
import math

import jax
import jax.numpy as jnp
from jax.experimental import pallas as pl
from jax.experimental.pallas import tpu as pltpu

H = 28              # LSTM hidden size (logical)
Hp = 32             # padded hidden size (lane-friendly)
T = 28              # sequence length (forced by reshape to 28*28)
EMB_IN = 2
EMB_MID = 500
EMB_MID_P = 512     # padded
EMB_OUT = 64
G4 = 4 * Hp         # fused gate width = 128
UNROLL = 4          # manual unroll factor of the time loop (seq must divide)


def _vmem_spec():
    # whole array resident in VMEM (everything here is tiny)
    return pl.BlockSpec(memory_space=pltpu.MemorySpace.VMEM)


# ---------------------------------------------------------------------------
# Single fused kernel: emb MLP -> 2-layer LSTM -> out1/out2/out3
# Gate order (i, f, g, o), PyTorch equations:
#   i = sig(x Wi + h Ui + bi)  f = sig(...)  g = tanh(...)  o = sig(...)
#   c' = f*c + i*g ; h' = o*tanh(c')
# Padded lanes (28..31 of each gate / state) stay exactly zero because padded
# weight rows/cols and biases are zero and the initial state is zero.
# ---------------------------------------------------------------------------
def fused_rnn_kernel(x_ref, ew1_ref, eb1_ref, ew2_ref, eb2_ref,
                     wih0_ref, whh0_ref, b0_ref,
                     w1cat_ref, b1_ref,
                     o1w_ref, o1b_ref, o2w_ref, o2b_ref, o3w_ref, o3b_ref,
                     out_ref, xp_ref, *, batch, seq):
    f32 = jnp.float32

    # ---- embedding MLP on TIME-MAJOR rows (row = t*batch + b) --------------
    x = x_ref[...]                                   # (T*B, 2)
    w1 = ew1_ref[...]                                # (2, 512)
    # K=2 contraction on the VPU (two broadcast FMAs) instead of the MXU.
    h = x[:, 0:1] * w1[0:1, :] + x[:, 1:2] * w1[1:2, :] + eb1_ref[...]
    h = jnp.maximum(h, 0.0)                          # ReLU; Dropout == identity (eval)
    e = jnp.dot(h, ew2_ref[...], preferred_element_type=f32) + eb2_ref[...]
    e = jnp.maximum(e, 0.0)                          # (T*B, 64)

    # ---- hoist layer-0 input projection (+ bias) out of the recurrence -----
    # each timestep's B rows are now contiguous: rows [t*B, (t+1)*B)
    xp_ref[...] = jnp.dot(e, wih0_ref[...], preferred_element_type=f32) + b0_ref[...]

    # ---- hoist recurrent weights / biases (loaded once, kept in vregs) -----
    whh0 = whh0_ref[...]                             # (32, 128)
    w1cat = w1cat_ref[...]                           # (64, 128) = [wih1 ; whh1]
    b1l = b1_ref[...]                                # (1, 128)

    def gates(pre):                                  # pre: (B, 128)
        sig = jax.nn.sigmoid(pre)                    # one full-width pass -> i, f, o
        g = jnp.tanh(pre[:, 2 * Hp:3 * Hp])          # tanh ONLY over the g quarter
        return sig[:, 0:Hp], sig[:, Hp:2 * Hp], g, sig[:, 3 * Hp:4 * Hp]

    def step(t_base, j, carry):
        h1, c1, h2, c2, acc1 = carry
        # single aligned-ish slice load of this step's B projected rows
        row0 = pl.multiple_of(t_base * batch, UNROLL * batch) + j * batch
        xp_t = xp_ref[pl.ds(row0, batch), :]         # (B, 128)

        # --- layer 0 cell ---
        pre0 = xp_t + jnp.dot(h1, whh0, preferred_element_type=f32)
        i0, f0, g0, o0 = gates(pre0)
        c1 = f0 * c1 + i0 * g0
        h1 = o0 * jnp.tanh(c1)

        # --- layer 1 cell: one fused matmul over [h1 ; h2] ---
        h12 = jnp.concatenate([h1, h2], axis=1)      # (B, 64)
        pre1 = jnp.dot(h12, w1cat, preferred_element_type=f32) + b1l
        i1, f1, g1, o1 = gates(pre1)
        c2 = f1 * c2 + i1 * g1
        h2 = o1 * jnp.tanh(c2)

        # --- fold out1 (Linear(784, 64)) into the loop: acc += h2_t @ W1[t] ---
        acc1 = acc1 + jnp.dot(h2, o1w_ref[t_base + j], preferred_element_type=f32)
        return (h1, c1, h2, c2, acc1)

    zeros = jnp.zeros((batch, Hp), f32)
    init = (zeros, zeros, zeros, zeros, jnp.zeros((batch, EMB_OUT), f32))

    def block(k, carry):                             # 4 statically-unrolled steps / iter
        t_base = k * UNROLL
        for j in range(UNROLL):
            carry = step(t_base, j, carry)
        return carry

    h1, c1, h2, c2, acc1 = jax.lax.fori_loop(0, seq // UNROLL, block, init)

    # ---- output MLP ---------------------------------------------------------
    hh = jnp.maximum(acc1 + o1b_ref[...], 0.0)
    hh = jnp.maximum(jnp.dot(hh, o2w_ref[...], preferred_element_type=f32)
                     + o2b_ref[...], 0.0)
    out_ref[...] = jnp.dot(hh, o3w_ref[...], preferred_element_type=f32) + o3b_ref[...]


def fused_rnn(x_tm, kp, batch, seq):
    assert seq % UNROLL == 0, (seq, UNROLL)
    kernel = functools.partial(fused_rnn_kernel, batch=batch, seq=seq)
    args = (x_tm,
            kp["emb_w1"], kp["emb_b1"], kp["emb_w2"], kp["emb_b2"],
            kp["wih0"], kp["whh0"], kp["b0"],
            kp["w1cat"], kp["b1"],
            kp["o1_w"], kp["o1_b"], kp["o2_w"], kp["o2_b"], kp["o3_w"], kp["o3_b"])
    return pl.pallas_call(
        kernel,
        out_shape=jax.ShapeDtypeStruct((batch, 1), jnp.float32),
        in_specs=[_vmem_spec()] * len(args),
        out_specs=_vmem_spec(),
        scratch_shapes=[pltpu.VMEM((batch * seq, G4), jnp.float32)],  # layer-0 projections
    )(*args)


def rnn_forward(x, kp):
    B, Tt, F = x.shape
    # Time-major reorder (T, B, F): a few hundred bytes, free; makes each timestep's
    # B rows contiguous in the hoisted layer-0 projection scratch.
    x_tm = jnp.transpose(x, (1, 0, 2)).reshape(Tt * B, F)
    return fused_rnn(x_tm, kp, B, Tt)


# ---------------------------------------------------------------------------
# Deterministic parameter init (PyTorch-default-style uniform bounds),
# stored in "natural" (unpadded, per-gate-stacked) layout for the reference.
# ---------------------------------------------------------------------------
def init_params(key):
    def uni(k, shape, bound):
        return jax.random.uniform(k, shape, jnp.float32, -bound, bound)

    ks = jax.random.split(key, 20)
    kh = 1.0 / math.sqrt(H)
    p = {
        "emb_w1": uni(ks[0], (EMB_IN, EMB_MID), 1.0 / math.sqrt(EMB_IN)),
        "emb_b1": uni(ks[1], (1, EMB_MID), 1.0 / math.sqrt(EMB_IN)),
        "emb_w2": uni(ks[2], (EMB_MID, EMB_OUT), 1.0 / math.sqrt(EMB_MID)),
        "emb_b2": uni(ks[3], (1, EMB_OUT), 1.0 / math.sqrt(EMB_MID)),
        # LSTM layer 0: input 64 -> hidden 28 ; per-gate stacked (i, f, g, o)
        "wih0": uni(ks[4], (4, EMB_OUT, H), kh),
        "whh0": uni(ks[5], (4, H, H), kh),
        "b0": uni(ks[6], (4, 1, H), kh) + uni(ks[7], (4, 1, H), kh),   # b_ih + b_hh
        # LSTM layer 1: input 28 -> hidden 28
        "wih1": uni(ks[8], (4, H, H), kh),
        "whh1": uni(ks[9], (4, H, H), kh),
        "b1": uni(ks[10], (4, 1, H), kh) + uni(ks[11], (4, 1, H), kh),
        "o1_w": uni(ks[12], (H * T, 64), 1.0 / math.sqrt(H * T)),
        "o1_b": uni(ks[13], (1, 64), 1.0 / math.sqrt(H * T)),
        "o2_w": uni(ks[14], (64, 32), 1.0 / math.sqrt(64)),
        "o2_b": uni(ks[15], (1, 32), 1.0 / math.sqrt(64)),
        "o3_w": uni(ks[16], (32, 1), 1.0 / math.sqrt(32)),
        "o3_b": uni(ks[17], (1, 1), 1.0 / math.sqrt(32)),
    }
    return p


# ---------------------------------------------------------------------------
# Pad / repack params into the fused-gate, lane-padded kernel layout.
#
# EXACTNESS INVARIANT: every padded weight row/column and bias lane below is
# ZERO and the initial LSTM state is zero, so padded state lanes (H..Hp) stay
# exactly zero for all t and the o1 accumulation is exact.  If a nonzero
# initial state or externally-trained unpadded weights are ever plugged in,
# re-verify this invariant.
# ---------------------------------------------------------------------------
def prepare_kernel_params(p):
    def gate_w(w, pad_in):                 # (4, in, H) -> (in[_pad], 4*Hp)
        gp = jnp.pad(w, ((0, 0), (0, Hp - H if pad_in else 0), (0, Hp - H)))
        return jnp.transpose(gp, (1, 0, 2)).reshape(gp.shape[1], G4)

    def gate_b(b):                         # (4, 1, H) -> (1, 4*Hp)
        gp = jnp.pad(b, ((0, 0), (0, 0), (0, Hp - H)))
        return jnp.transpose(gp, (1, 0, 2)).reshape(1, G4)

    wih1_p = gate_w(p["wih1"], pad_in=True)          # (32, 128)
    whh1_p = gate_w(p["whh1"], pad_in=True)          # (32, 128)

    kp = {
        "emb_w1": jnp.pad(p["emb_w1"], ((0, 0), (0, EMB_MID_P - EMB_MID))),
        "emb_b1": jnp.pad(p["emb_b1"], ((0, 0), (0, EMB_MID_P - EMB_MID))),
        "emb_w2": jnp.pad(p["emb_w2"], ((0, EMB_MID_P - EMB_MID), (0, 0))),
        "emb_b2": p["emb_b2"],
        "wih0": gate_w(p["wih0"], pad_in=False),     # (64, 128)
        "whh0": gate_w(p["whh0"], pad_in=True),      # (32, 128)
        "b0": gate_b(p["b0"]),                       # (1, 128)
        "w1cat": jnp.concatenate([wih1_p, whh1_p], axis=0),   # (64, 128) = [wih1 ; whh1]
        "b1": gate_b(p["b1"]),                       # (1, 128)
        "o1_w": jnp.pad(p["o1_w"].reshape(T, H, 64), ((0, 0), (0, Hp - H), (0, 0))),
        "o1_b": p["o1_b"],
        "o2_w": p["o2_w"], "o2_b": p["o2_b"],
        "o3_w": p["o3_w"], "o3_b": p["o3_b"],
    }
    return jax.tree_util.tree_map(lambda a: a.astype(jnp.float32), kp)


# ---------------------------------------------------------------------------
# Pure-JAX reference for correctness check (unpadded params)
# ---------------------------------------------------------------------------
def reference_forward(x, p):
    hp = jax.lax.Precision.HIGHEST
    B, Tt, F = x.shape

    def lin(a, w, b):
        return jnp.dot(a, w, precision=hp) + b

    e = jnp.maximum(lin(x.reshape(B * Tt, F), p["emb_w1"], p["emb_b1"]), 0.0)
    e = jnp.maximum(lin(e, p["emb_w2"], p["emb_b2"]), 0.0)
    x_seq = e.reshape(B, Tt, EMB_OUT).transpose(1, 0, 2)   # (T, B, 64)

    def lstm_layer(seq, wih, whh, bias):
        def cell(carry, x_t):
            h, c = carry

            def pre(g):
                return (jnp.dot(x_t, wih[g], precision=hp)
                        + jnp.dot(h, whh[g], precision=hp) + bias[g])
            i = jax.nn.sigmoid(pre(0))
            f = jax.nn.sigmoid(pre(1))
            g = jnp.tanh(pre(2))
            o = jax.nn.sigmoid(pre(3))
            c_new = f * c + i * g
            h_new = o * jnp.tanh(c_new)
            return (h_new, c_new), h_new
        init = (jnp.zeros((B, H), jnp.float32), jnp.zeros((B, H), jnp.float32))
        _, hs = jax.lax.scan(cell, init, seq)
        return hs

    l1 = lstm_layer(x_seq, p["wih0"], p["whh0"], p["b0"])
    r_out = lstm_layer(l1, p["wih1"], p["whh1"], p["b1"])     # (T, B, 28)
    r_flat = r_out.transpose(1, 0, 2).reshape(B, Tt * H)
    h1 = jnp.maximum(lin(r_flat, p["o1_w"], p["o1_b"]), 0.0)
    h2 = jnp.maximum(lin(h1, p["o2_w"], p["o2_b"]), 0.0)
    return lin(h2, p["o3_w"], p["o3_b"])


if __name__ == "__main__":
    key = jax.random.PRNGKey(0)
    pkey, xkey = jax.random.split(key)
    params = init_params(pkey)
    kparams = prepare_kernel_params(params)

    B = 2
    x = jax.random.normal(xkey, (B, T, EMB_IN), jnp.float32)   # (batch=2, seq=28, feat=2)

    out = jax.jit(rnn_forward)(x, kparams)
    out = jax.block_until_ready(out)
    assert out.shape == (B, 1), out.shape

    ref = reference_forward(x, params)
    if not jnp.allclose(out, ref, atol=1e-3, rtol=1e-3):
        raise AssertionError(f"mismatch: pallas={out}, ref={ref}")

    print("KERNEL_OK")
</pallas_src>

<mosaic_0001>
module attributes {stable_mosaic.version = 11 : i64} {
  func.func @fused_rnn_kernel(%arg0: memref<56x2xf32, #tpu.memory_space<vmem>>, %arg1: memref<2x512xf32, #tpu.memory_space<vmem>>, %arg2: memref<1x512xf32, #tpu.memory_space<vmem>>, %arg3: memref<512x64xf32, #tpu.memory_space<vmem>>, %arg4: memref<1x64xf32, #tpu.memory_space<vmem>>, %arg5: memref<64x128xf32, #tpu.memory_space<vmem>>, %arg6: memref<32x128xf32, #tpu.memory_space<vmem>>, %arg7: memref<1x128xf32, #tpu.memory_space<vmem>>, %arg8: memref<64x128xf32, #tpu.memory_space<vmem>>, %arg9: memref<1x128xf32, #tpu.memory_space<vmem>>, %arg10: memref<28x32x64xf32, #tpu.memory_space<vmem>>, %arg11: memref<1x64xf32, #tpu.memory_space<vmem>>, %arg12: memref<64x32xf32, #tpu.memory_space<vmem>>, %arg13: memref<1x32xf32, #tpu.memory_space<vmem>>, %arg14: memref<32x1xf32, #tpu.memory_space<vmem>>, %arg15: memref<1x1xf32, #tpu.memory_space<vmem>>, %arg16: memref<2x1xf32, #tpu.memory_space<vmem>>, %arg17: memref<56x128xf32, #tpu.memory_space<vmem>>) attributes {dimension_semantics = [], scalar_prefetch = 0 : i64, scratch_operands = 1 : i64, tpu.core_type = #tpu.core_type<tc>} {
    %c0 = arith.constant 0 : index
    %c0_0 = arith.constant 0 : index
    %0 = vector.load %arg0[%c0, %c0_0] : memref<56x2xf32, #tpu.memory_space<vmem>>, vector<56x2xf32>
    %c0_1 = arith.constant 0 : index
    %c0_2 = arith.constant 0 : index
    %1 = vector.load %arg1[%c0_1, %c0_2] : memref<2x512xf32, #tpu.memory_space<vmem>>, vector<2x512xf32>
    %2 = vector.extract_strided_slice %0 {offsets = [0, 0], sizes = [56, 1], strides = [1, 1]} : vector<56x2xf32> to vector<56x1xf32>
    %3 = vector.extract_strided_slice %1 {offsets = [0, 0], sizes = [1, 512], strides = [1, 1]} : vector<2x512xf32> to vector<1x512xf32>
    %4 = vector.broadcast %2 : vector<56x1xf32> to vector<56x512xf32>
    %5 = vector.broadcast %3 : vector<1x512xf32> to vector<56x512xf32>
    %6 = arith.mulf %4, %5 : vector<56x512xf32>
    %7 = vector.extract_strided_slice %0 {offsets = [0, 1], sizes = [56, 1], strides = [1, 1]} : vector<56x2xf32> to vector<56x1xf32>
    %8 = vector.extract_strided_slice %1 {offsets = [1, 0], sizes = [1, 512], strides = [1, 1]} : vector<2x512xf32> to vector<1x512xf32>
    %9 = vector.broadcast %7 : vector<56x1xf32> to vector<56x512xf32>
    %10 = vector.broadcast %8 : vector<1x512xf32> to vector<56x512xf32>
    %11 = arith.mulf %9, %10 : vector<56x512xf32>
    %12 = arith.addf %6, %11 : vector<56x512xf32>
    %c0_3 = arith.constant 0 : index
    %c0_4 = arith.constant 0 : index
    %13 = vector.load %arg2[%c0_3, %c0_4] : memref<1x512xf32, #tpu.memory_space<vmem>>, vector<1x512xf32>
    %14 = vector.broadcast %13 : vector<1x512xf32> to vector<56x512xf32>
    %15 = arith.addf %12, %14 : vector<56x512xf32>
    %cst = arith.constant 0.000000e+00 : f32
    %16 = vector.broadcast %cst : f32 to vector<56x512xf32>
    %17 = arith.maximumf %15, %16 : vector<56x512xf32>
    %c0_5 = arith.constant 0 : index
    %c0_6 = arith.constant 0 : index
    %18 = vector.load %arg3[%c0_5, %c0_6] : memref<512x64xf32, #tpu.memory_space<vmem>>, vector<512x64xf32>
    %cst_7 = arith.constant dense<0.000000e+00> : vector<56x64xf32>
    %19 = tpu.matmul %17, %18, %cst_7 {dimension_numbers = #tpu.dot_dimension_numbers<[1], [0], [0], [1], [0, 0, 1, 1], [], []>} : vector<56x512xf32>, vector<512x64xf32>, vector<56x64xf32> -> vector<56x64xf32>
    %c0_8 = arith.constant 0 : index
    %c0_9 = arith.constant 0 : index
    %20 = vector.load %arg4[%c0_8, %c0_9] : memref<1x64xf32, #tpu.memory_space<vmem>>, vector<1x64xf32>
    %21 = vector.broadcast %20 : vector<1x64xf32> to vector<56x64xf32>
    %22 = arith.addf %19, %21 : vector<56x64xf32>
    %cst_10 = arith.constant 0.000000e+00 : f32
    %23 = vector.broadcast %cst_10 : f32 to vector<56x64xf32>
    %24 = arith.maximumf %22, %23 : vector<56x64xf32>
    %c0_11 = arith.constant 0 : index
    %c0_12 = arith.constant 0 : index
    %25 = vector.load %arg5[%c0_11, %c0_12] : memref<64x128xf32, #tpu.memory_space<vmem>>, vector<64x128xf32>
    %cst_13 = arith.constant dense<0.000000e+00> : vector<56x128xf32>
    %26 = tpu.matmul %24, %25, %cst_13 {dimension_numbers = #tpu.dot_dimension_numbers<[1], [0], [0], [1], [0, 0, 1, 1], [], []>} : vector<56x64xf32>, vector<64x128xf32>, vector<56x128xf32> -> vector<56x128xf32>
    %c0_14 = arith.constant 0 : index
    %c0_15 = arith.constant 0 : index
    %27 = vector.load %arg7[%c0_14, %c0_15] : memref<1x128xf32, #tpu.memory_space<vmem>>, vector<1x128xf32>
    %28 = vector.broadcast %27 : vector<1x128xf32> to vector<56x128xf32>
    %29 = arith.addf %26, %28 : vector<56x128xf32>
    %c0_16 = arith.constant 0 : index
    %c0_17 = arith.constant 0 : index
    %30 = vector.load %arg17[%c0_16, %c0_17] : memref<56x128xf32, #tpu.memory_space<vmem>>, vector<56x128xf32>
    tpu.vector_store %arg17[%c0_16, %c0_17], %29 {strides = array<i32>} : memref<56x128xf32, #tpu.memory_space<vmem>>, vector<56x128xf32>,
    %c0_18 = arith.constant 0 : index
    %c0_19 = arith.constant 0 : index
    %31 = vector.load %arg6[%c0_18, %c0_19] : memref<32x128xf32, #tpu.memory_space<vmem>>, vector<32x128xf32>
    %c0_20 = arith.constant 0 : index
    %c0_21 = arith.constant 0 : index
    %32 = vector.load %arg8[%c0_20, %c0_21] : memref<64x128xf32, #tpu.memory_space<vmem>>, vector<64x128xf32>
    %c0_22 = arith.constant 0 : index
    %c0_23 = arith.constant 0 : index
    %33 = vector.load %arg9[%c0_22, %c0_23] : memref<1x128xf32, #tpu.memory_space<vmem>>, vector<1x128xf32>
    %cst_24 = arith.constant 0.000000e+00 : f32
    %34 = vector.broadcast %cst_24 : f32 to vector<2x32xf32>
    %cst_25 = arith.constant 0.000000e+00 : f32
    %35 = vector.broadcast %cst_25 : f32 to vector<2x64xf32>
    %c0_i32 = arith.constant 0 : i32
    %c7_i32 = arith.constant 7 : i32
    %36 = arith.addi %c0_i32, %c7_i32 : i32
    %c1_i32 = arith.constant 1 : i32
    %37:5 = scf.for %arg18 = %c0_i32 to %36 step %c1_i32 iter_args(%arg19 = %34, %arg20 = %34, %arg21 = %34, %arg22 = %34, %arg23 = %35) -> (vector<2x32xf32>, vector<2x32xf32>, vector<2x32xf32>, vector<2x32xf32>, vector<2x64xf32>)  : i32 {
      %c4_i32 = arith.constant 4 : i32
      %56 = arith.muli %arg18, %c4_i32 : i32
      %c2_i32 = arith.constant 2 : i32
      %57 = arith.muli %56, %c2_i32 : i32
      %58 = tpu.assume_multiple %57, 8 : i32
      %c0_i32_43 = arith.constant 0 : i32
      %59 = arith.addi %58, %c0_i32_43 : i32
      %60 = arith.index_cast %59 : i32 to index
      %c0_44 = arith.constant 0 : index
      %61 = vector.load %arg17[%60, %c0_44] : memref<56x128xf32, #tpu.memory_space<vmem>>, vector<2x128xf32>
      %cst_45 = arith.constant dense<0.000000e+00> : vector<2x128xf32>
      %62 = tpu.matmul %arg19, %31, %cst_45 {dimension_numbers = #tpu.dot_dimension_numbers<[1], [0], [0], [1], [0, 0, 1, 1], [], []>} : vector<2x32xf32>, vector<32x128xf32>, vector<2x128xf32> -> vector<2x128xf32>
      %63 = arith.addf %61, %62 : vector<2x128xf32>
      %64 = arith.negf %63 : vector<2x128xf32>
      %65 = math.exp %64 : vector<2x128xf32>
      %cst_46 = arith.constant 1.000000e+00 : f32
      %66 = vector.broadcast %cst_46 : f32 to vector<2x128xf32>
      %67 = arith.addf %66, %65 : vector<2x128xf32>
      %68 = arith.divf %66, %67 : vector<2x128xf32>
      %69 = vector.extract_strided_slice %63 {offsets = [0, 64], sizes = [2, 32], strides = [1, 1]} : vector<2x128xf32> to vector<2x32xf32>
      %70 = math.tanh %69 : vector<2x32xf32>
      %71 = vector.extract_strided_slice %68 {offsets = [0, 0], sizes = [2, 32], strides = [1, 1]} : vector<2x128xf32> to vector<2x32xf32>
      %72 = vector.extract_strided_slice %68 {offsets = [0, 32], sizes = [2, 32], strides = [1, 1]} : vector<2x128xf32> to vector<2x32xf32>
      %73 = vector.extract_strided_slice %68 {offsets = [0, 96], sizes = [2, 32], strides = [1, 1]} : vector<2x128xf32> to vector<2x32xf32>
      %74 = arith.mulf %72, %arg20 : vector<2x32xf32>
      %75 = arith.mulf %71, %70 : vector<2x32xf32>
      %76 = arith.addf %74, %75 : vector<2x32xf32>
      %77 = math.tanh %76 : vector<2x32xf32>
      %78 = arith.mulf %73, %77 : vector<2x32xf32>
      %79 = tpu.concatenate %78, %arg21 in 1 : vector<2x32xf32>, vector<2x32xf32> -> vector<2x64xf32>
      %cst_47 = arith.constant dense<0.000000e+00> : vector<2x128xf32>
      %80 = tpu.matmul %79, %32, %cst_47 {dimension_numbers = #tpu.dot_dimension_numbers<[1], [0], [0], [1], [0, 0, 1, 1], [], []>} : vector<2x64xf32>, vector<64x128xf32>, vector<2x128xf32> -> vector<2x128xf32>
      %81 = vector.broadcast %33 : vector<1x128xf32> to vector<2x128xf32>
      %82 = arith.addf %80, %81 : vector<2x128xf32>
      %83 = arith.negf %82 : vector<2x128xf32>
      %84 = math.exp %83 : vector<2x128xf32>
      %cst_48 = arith.constant 1.000000e+00 : f32
      %85 = vector.broadcast %cst_48 : f32 to vector<2x128xf32>
      %86 = arith.addf %85, %84 : vector<2x128xf32>
      %87 = arith.divf %85, %86 : vector<2x128xf32>
      %88 = vector.extract_strided_slice %82 {offsets = [0, 64], sizes = [2, 32], strides = [1, 1]} : vector<2x128xf32> to vector<2x32xf32>
      %89 = math.tanh %88 : vector<2x32xf32>
      %90 = vector.extract_strided_slice %87 {offsets = [0, 0], sizes = [2, 32], strides = [1, 1]} : vector<2x128xf32> to vector<2x32xf32>
      %91 = vector.extract_strided_slice %87 {offsets = [0, 32], sizes = [2, 32], strides = [1, 1]} : vector<2x128xf32> to vector<2x32xf32>
      %92 = vector.extract_strided_slice %87 {offsets = [0, 96], sizes = [2, 32], strides = [1, 1]} : vector<2x128xf32> to vector<2x32xf32>
      %93 = arith.mulf %91, %arg22 : vector<2x32xf32>
      %94 = arith.mulf %90, %89 : vector<2x32xf32>
      %95 = arith.addf %93, %94 : vector<2x32xf32>
      %96 = math.tanh %95 : vector<2x32xf32>
      %97 = arith.mulf %92, %96 : vector<2x32xf32>
      %c0_i32_49 = arith.constant 0 : i32
      %98 = arith.addi %56, %c0_i32_49 : i32
      %99 = arith.index_cast %98 : i32 to index
      %c0_50 = arith.constant 0 : index
      %c0_51 = arith.constant 0 : index
      %100 = vector.load %arg10[%99, %c0_50, %c0_51] : memref<28x32x64xf32, #tpu.memory_space<vmem>>, vector<1x32x64xf32>
      %101 = vector.shape_cast %100 : vector<1x32x64xf32> to vector<32x64xf32>
      %cst_52 = arith.constant dense<0.000000e+00> : vector<2x64xf32>
      %102 = tpu.matmul %97, %101, %cst_52 {dimension_numbers = #tpu.dot_dimension_numbers<[1], [0], [0], [1], [0, 0, 1, 1], [], []>} : vector<2x32xf32>, vector<32x64xf32>, vector<2x64xf32> -> vector<2x64xf32>
      %103 = arith.addf %arg23, %102 : vector<2x64xf32>
      %c2_i32_53 = arith.constant 2 : i32
      %104 = arith.muli %56, %c2_i32_53 : i32
      %105 = tpu.assume_multiple %104, 8 : i32
      %c2_i32_54 = arith.constant 2 : i32
      %106 = arith.addi %105, %c2_i32_54 : i32
      %107 = arith.index_cast %106 : i32 to index
      %c0_55 = arith.constant 0 : index
      %108 = vector.load %arg17[%107, %c0_55] : memref<56x128xf32, #tpu.memory_space<vmem>>, vector<2x128xf32>
      %cst_56 = arith.constant dense<0.000000e+00> : vector<2x128xf32>
      %109 = tpu.matmul %78, %31, %cst_56 {dimension_numbers = #tpu.dot_dimension_numbers<[1], [0], [0], [1], [0, 0, 1, 1], [], []>} : vector<2x32xf32>, vector<32x128xf32>, vector<2x128xf32> -> vector<2x128xf32>
      %110 = arith.addf %108, %109 : vector<2x128xf32>
      %111 = arith.negf %110 : vector<2x128xf32>
      %112 = math.exp %111 : vector<2x128xf32>
      %cst_57 = arith.constant 1.000000e+00 : f32
      %113 = vector.broadcast %cst_57 : f32 to vector<2x128xf32>
      %114 = arith.addf %113, %112 : vector<2x128xf32>
      %115 = arith.divf %113, %114 : vector<2x128xf32>
      %116 = vector.extract_strided_slice %110 {offsets = [0, 64], sizes = [2, 32], strides = [1, 1]} : vector<2x128xf32> to vector<2x32xf32>
      %117 = math.tanh %116 : vector<2x32xf32>
      %118 = vector.extract_strided_slice %115 {offsets = [0, 0], sizes = [2, 32], strides = [1, 1]} : vector<2x128xf32> to vector<2x32xf32>
      %119 = vector.extract_strided_slice %115 {offsets = [0, 32], sizes = [2, 32], strides = [1, 1]} : vector<2x128xf32> to vector<2x32xf32>
      %120 = vector.extract_strided_slice %115 {offsets = [0, 96], sizes = [2, 32], strides = [1, 1]} : vector<2x128xf32> to vector<2x32xf32>
      %121 = arith.mulf %119, %76 : vector<2x32xf32>
      %122 = arith.mulf %118, %117 : vector<2x32xf32>
      %123 = arith.addf %121, %122 : vector<2x32xf32>
      %124 = math.tanh %123 : vector<2x32xf32>
      %125 = arith.mulf %120, %124 : vector<2x32xf32>
      %126 = tpu.concatenate %125, %97 in 1 : vector<2x32xf32>, vector<2x32xf32> -> vector<2x64xf32>
      %cst_58 = arith.constant dense<0.000000e+00> : vector<2x128xf32>
      %127 = tpu.matmul %126, %32, %cst_58 {dimension_numbers = #tpu.dot_dimension_numbers<[1], [0], [0], [1], [0, 0, 1, 1], [], []>} : vector<2x64xf32>, vector<64x128xf32>, vector<2x128xf32> -> vector<2x128xf32>
      %128 = vector.broadcast %33 : vector<1x128xf32> to vector<2x128xf32>
      %129 = arith.addf %127, %128 : vector<2x128xf32>
      %130 = arith.negf %129 : vector<2x128xf32>
      %131 = math.exp %130 : vector<2x128xf32>
      %cst_59 = arith.constant 1.000000e+00 : f32
      %132 = vector.broadcast %cst_59 : f32 to vector<2x128xf32>
      %133 = arith.addf %132, %131 : vector<2x128xf32>
      %134 = arith.divf %132, %133 : vector<2x128xf32>
      %135 = vector.extract_strided_slice %129 {offsets = [0, 64], sizes = [2, 32], strides = [1, 1]} : vector<2x128xf32> to vector<2x32xf32>
      %136 = math.tanh %135 : vector<2x32xf32>
      %137 = vector.extract_strided_slice %134 {offsets = [0, 0], sizes = [2, 32], strides = [1, 1]} : vector<2x128xf32> to vector<2x32xf32>
      %138 = vector.extract_strided_slice %134 {offsets = [0, 32], sizes = [2, 32], strides = [1, 1]} : vector<2x128xf32> to vector<2x32xf32>
      %139 = vector.extract_strided_slice %134 {offsets = [0, 96], sizes = [2, 32], strides = [1, 1]} : vector<2x128xf32> to vector<2x32xf32>
      %140 = arith.mulf %138, %95 : vector<2x32xf32>
      %141 = arith.mulf %137, %136 : vector<2x32xf32>
      %142 = arith.addf %140, %141 : vector<2x32xf32>
      %143 = math.tanh %142 : vector<2x32xf32>
      %144 = arith.mulf %139, %143 : vector<2x32xf32>
      %c1_i32_60 = arith.constant 1 : i32
      %145 = arith.addi %56, %c1_i32_60 : i32
      %146 = arith.index_cast %145 : i32 to index
      %c0_61 = arith.constant 0 : index
      %c0_62 = arith.constant 0 : index
      %147 = vector.load %arg10[%146, %c0_61, %c0_62] : memref<28x32x64xf32, #tpu.memory_space<vmem>>, vector<1x32x64xf32>
      %148 = vector.shape_cast %147 : vector<1x32x64xf32> to vector<32x64xf32>
      %cst_63 = arith.constant dense<0.000000e+00> : vector<2x64xf32>
      %149 = tpu.matmul %144, %148, %cst_63 {dimension_numbers = #tpu.dot_dimension_numbers<[1], [0], [0], [1], [0, 0, 1, 1], [], []>} : vector<2x32xf32>, vector<32x64xf32>, vector<2x64xf32> -> vector<2x64xf32>
      %150 = arith.addf %103, %149 : vector<2x64xf32>
      %c2_i32_64 = arith.constant 2 : i32
      %151 = arith.muli %56, %c2_i32_64 : i32
      %152 = tpu.assume_multiple %151, 8 : i32
      %c4_i32_65 = arith.constant 4 : i32
      %153 = arith.addi %152, %c4_i32_65 : i32
      %154 = arith.index_cast %153 : i32 to index
      %c0_66 = arith.constant 0 : index
      %155 = vector.load %arg17[%154, %c0_66] : memref<56x128xf32, #tpu.memory_space<vmem>>, vector<2x128xf32>
      %cst_67 = arith.constant dense<0.000000e+00> : vector<2x128xf32>
      %156 = tpu.matmul %125, %31, %cst_67 {dimension_numbers = #tpu.dot_dimension_numbers<[1], [0], [0], [1], [0, 0, 1, 1], [], []>} : vector<2x32xf32>, vector<32x128xf32>, vector<2x128xf32> -> vector<2x128xf32>
      %157 = arith.addf %155, %156 : vector<2x128xf32>
      %158 = arith.negf %157 : vector<2x128xf32>
      %159 = math.exp %158 : vector<2x128xf32>
      %cst_68 = arith.constant 1.000000e+00 : f32
      %160 = vector.broadcast %cst_68 : f32 to vector<2x128xf32>
      %161 = arith.addf %160, %159 : vector<2x128xf32>
      %162 = arith.divf %160, %161 : vector<2x128xf32>
      %163 = vector.extract_strided_slice %157 {offsets = [0, 64], sizes = [2, 32], strides = [1, 1]} : vector<2x128xf32> to vector<2x32xf32>
      %164 = math.tanh %163 : vector<2x32xf32>
      %165 = vector.extract_strided_slice %162 {offsets = [0, 0], sizes = [2, 32], strides = [1, 1]} : vector<2x128xf32> to vector<2x32xf32>
      %166 = vector.extract_strided_slice %162 {offsets = [0, 32], sizes = [2, 32], strides = [1, 1]} : vector<2x128xf32> to vector<2x32xf32>
      %167 = vector.extract_strided_slice %162 {offsets = [0, 96], sizes = [2, 32], strides = [1, 1]} : vector<2x128xf32> to vector<2x32xf32>
      %168 = arith.mulf %166, %123 : vector<2x32xf32>
      %169 = arith.mulf %165, %164 : vector<2x32xf32>
      %170 = arith.addf %168, %169 : vector<2x32xf32>
      %171 = math.tanh %170 : vector<2x32xf32>
      %172 = arith.mulf %167, %171 : vector<2x32xf32>
      %173 = tpu.concatenate %172, %144 in 1 : vector<2x32xf32>, vector<2x32xf32> -> vector<2x64xf32>
      %cst_69 = arith.constant dense<0.000000e+00> : vector<2x128xf32>
      %174 = tpu.matmul %173, %32, %cst_69 {dimension_numbers = #tpu.dot_dimension_numbers<[1], [0], [0], [1], [0, 0, 1, 1], [], []>} : vector<2x64xf32>, vector<64x128xf32>, vector<2x128xf32> -> vector<2x128xf32>
      %175 = vector.broadcast %33 : vector<1x128xf32> to vector<2x128xf32>
      %176 = arith.addf %174, %175 : vector<2x128xf32>
      %177 = arith.negf %176 : vector<2x128xf32>
      %178 = math.exp %177 : vector<2x128xf32>
      %cst_70 = arith.constant 1.000000e+00 : f32
      %179 = vector.broadcast %cst_70 : f32 to vector<2x128xf32>
      %180 = arith.addf %179, %178 : vector<2x128xf32>
      %181 = arith.divf %179, %180 : vector<2x128xf32>
      %182 = vector.extract_strided_slice %176 {offsets = [0, 64], sizes = [2, 32], strides = [1, 1]} : vector<2x128xf32> to vector<2x32xf32>
      %183 = math.tanh %182 : vector<2x32xf32>
      %184 = vector.extract_strided_slice %181 {offsets = [0, 0], sizes = [2, 32], strides = [1, 1]} : vector<2x128xf32> to vector<2x32xf32>
      %185 = vector.extract_strided_slice %181 {offsets = [0, 32], sizes = [2, 32], strides = [1, 1]} : vector<2x128xf32> to vector<2x32xf32>
      %186 = vector.extract_strided_slice %181 {offsets = [0, 96], sizes = [2, 32], strides = [1, 1]} : vector<2x128xf32> to vector<2x32xf32>
      %187 = arith.mulf %185, %142 : vector<2x32xf32>
      %188 = arith.mulf %184, %183 : vector<2x32xf32>
      %189 = arith.addf %187, %188 : vector<2x32xf32>
      %190 = math.tanh %189 : vector<2x32xf32>
      %191 = arith.mulf %186, %190 : vector<2x32xf32>
      %c2_i32_71 = arith.constant 2 : i32
      %192 = arith.addi %56, %c2_i32_71 : i32
      %193 = arith.index_cast %192 : i32 to index
      %c0_72 = arith.constant 0 : index
      %c0_73 = arith.constant 0 : index
      %194 = vector.load %arg10[%193, %c0_72, %c0_73] : memref<28x32x64xf32, #tpu.memory_space<vmem>>, vector<1x32x64xf32>
      %195 = vector.shape_cast %194 : vector<1x32x64xf32> to vector<32x64xf32>
      %cst_74 = arith.constant dense<0.000000e+00> : vector<2x64xf32>
      %196 = tpu.matmul %191, %195, %cst_74 {dimension_numbers = #tpu.dot_dimension_numbers<[1], [0], [0], [1], [0, 0, 1, 1], [], []>} : vector<2x32xf32>, vector<32x64xf32>, vector<2x64xf32> -> vector<2x64xf32>
      %197 = arith.addf %150, %196 : vector<2x64xf32>
      %c2_i32_75 = arith.constant 2 : i32
      %198 = arith.muli %56, %c2_i32_75 : i32
      %199 = tpu.assume_multiple %198, 8 : i32
      %c6_i32 = arith.constant 6 : i32
      %200 = arith.addi %199, %c6_i32 : i32
      %201 = arith.index_cast %200 : i32 to index
      %c0_76 = arith.constant 0 : index
      %202 = vector.load %arg17[%201, %c0_76] : memref<56x128xf32, #tpu.memory_space<vmem>>, vector<2x128xf32>
      %cst_77 = arith.constant dense<0.000000e+00> : vector<2x128xf32>
      %203 = tpu.matmul %172, %31, %cst_77 {dimension_numbers = #tpu.dot_dimension_numbers<[1], [0], [0], [1], [0, 0, 1, 1], [], []>} : vector<2x32xf32>, vector<32x128xf32>, vector<2x128xf32> -> vector<2x128xf32>
      %204 = arith.addf %202, %203 : vector<2x128xf32>
      %205 = arith.negf %204 : vector<2x128xf32>
      %206 = math.exp %205 : vector<2x128xf32>
      %cst_78 = arith.constant 1.000000e+00 : f32
      %207 = vector.broadcast %cst_78 : f32 to vector<2x128xf32>
      %208 = arith.addf %207, %206 : vector<2x128xf32>
      %209 = arith.divf %207, %208 : vector<2x128xf32>
      %210 = vector.extract_strided_slice %204 {offsets = [0, 64], sizes = [2, 32], strides = [1, 1]} : vector<2x128xf32> to vector<2x32xf32>
      %211 = math.tanh %210 : vector<2x32xf32>
      %212 = vector.extract_strided_slice %209 {offsets = [0, 0], sizes = [2, 32], strides = [1, 1]} : vector<2x128xf32> to vector<2x32xf32>
      %213 = vector.extract_strided_slice %209 {offsets = [0, 32], sizes = [2, 32], strides = [1, 1]} : vector<2x128xf32> to vector<2x32xf32>
      %214 = vector.extract_strided_slice %209 {offsets = [0, 96], sizes = [2, 32], strides = [1, 1]} : vector<2x128xf32> to vector<2x32xf32>
      %215 = arith.mulf %213, %170 : vector<2x32xf32>
      %216 = arith.mulf %212, %211 : vector<2x32xf32>
      %217 = arith.addf %215, %216 : vector<2x32xf32>
      %218 = math.tanh %217 : vector<2x32xf32>
      %219 = arith.mulf %214, %218 : vector<2x32xf32>
      %220 = tpu.concatenate %219, %191 in 1 : vector<2x32xf32>, vector<2x32xf32> -> vector<2x64xf32>
      %cst_79 = arith.constant dense<0.000000e+00> : vector<2x128xf32>
      %221 = tpu.matmul %220, %32, %cst_79 {dimension_numbers = #tpu.dot_dimension_numbers<[1], [0], [0], [1], [0, 0, 1, 1], [], []>} : vector<2x64xf32>, vector<64x128xf32>, vector<2x128xf32> -> vector<2x128xf32>
      %222 = vector.broadcast %33 : vector<1x128xf32> to vector<2x128xf32>
      %223 = arith.addf %221, %222 : vector<2x128xf32>
      %224 = arith.negf %223 : vector<2x128xf32>
      %225 = math.exp %224 : vector<2x128xf32>
      %cst_80 = arith.constant 1.000000e+00 : f32
      %226 = vector.broadcast %cst_80 : f32 to vector<2x128xf32>
      %227 = arith.addf %226, %225 : vector<2x128xf32>
      %228 = arith.divf %226, %227 : vector<2x128xf32>
      %229 = vector.extract_strided_slice %223 {offsets = [0, 64], sizes = [2, 32], strides = [1, 1]} : vector<2x128xf32> to vector<2x32xf32>
      %230 = math.tanh %229 : vector<2x32xf32>
      %231 = vector.extract_strided_slice %228 {offsets = [0, 0], sizes = [2, 32], strides = [1, 1]} : vector<2x128xf32> to vector<2x32xf32>
      %232 = vector.extract_strided_slice %228 {offsets = [0, 32], sizes = [2, 32], strides = [1, 1]} : vector<2x128xf32> to vector<2x32xf32>
      %233 = vector.extract_strided_slice %228 {offsets = [0, 96], sizes = [2, 32], strides = [1, 1]} : vector<2x128xf32> to vector<2x32xf32>
      %234 = arith.mulf %232, %189 : vector<2x32xf32>
      %235 = arith.mulf %231, %230 : vector<2x32xf32>
      %236 = arith.addf %234, %235 : vector<2x32xf32>
      %237 = math.tanh %236 : vector<2x32xf32>
      %238 = arith.mulf %233, %237 : vector<2x32xf32>
      %c3_i32 = arith.constant 3 : i32
      %239 = arith.addi %56, %c3_i32 : i32
      %240 = arith.index_cast %239 : i32 to index
      %c0_81 = arith.constant 0 : index
      %c0_82 = arith.constant 0 : index
      %241 = vector.load %arg10[%240, %c0_81, %c0_82] : memref<28x32x64xf32, #tpu.memory_space<vmem>>, vector<1x32x64xf32>
      %242 = vector.shape_cast %241 : vector<1x32x64xf32> to vector<32x64xf32>
      %cst_83 = arith.constant dense<0.000000e+00> : vector<2x64xf32>
      %243 = tpu.matmul %238, %242, %cst_83 {dimension_numbers = #tpu.dot_dimension_numbers<[1], [0], [0], [1], [0, 0, 1, 1], [], []>} : vector<2x32xf32>, vector<32x64xf32>, vector<2x64xf32> -> vector<2x64xf32>
      %244 = arith.addf %197, %243 : vector<2x64xf32>
      scf.yield %219, %217, %238, %236, %244 : vector<2x32xf32>, vector<2x32xf32>, vector<2x32xf32>, vector<2x32xf32>, vector<2x64xf32>
    }
    %c7_i32_26 = arith.constant 7 : i32
    %c0_27 = arith.constant 0 : index
    %c0_28 = arith.constant 0 : index
    %38 = vector.load %arg11[%c0_27, %c0_28] : memref<1x64xf32, #tpu.memory_space<vmem>>, vector<1x64xf32>
    %39 = vector.broadcast %38 : vector<1x64xf32> to vector<2x64xf32>
    %40 = arith.addf %37#4, %39 : vector<2x64xf32>
    %cst_29 = arith.constant 0.000000e+00 : f32
    %41 = vector.broadcast %cst_29 : f32 to vector<2x64xf32>
    %42 = arith.maximumf %40, %41 : vector<2x64xf32>
    %c0_30 = arith.constant 0 : index
    %c0_31 = arith.constant 0 : index
    %43 = vector.load %arg12[%c0_30, %c0_31] : memref<64x32xf32, #tpu.memory_space<vmem>>, vector<64x32xf32>
    %cst_32 = arith.constant dense<0.000000e+00> : vector<2x32xf32>
    %44 = tpu.matmul %42, %43, %cst_32 {dimension_numbers = #tpu.dot_dimension_numbers<[1], [0], [0], [1], [0, 0, 1, 1], [], []>} : vector<2x64xf32>, vector<64x32xf32>, vector<2x32xf32> -> vector<2x32xf32>
    %c0_33 = arith.constant 0 : index
    %c0_34 = arith.constant 0 : index
    %45 = vector.load %arg13[%c0_33, %c0_34] : memref<1x32xf32, #tpu.memory_space<vmem>>, vector<1x32xf32>
    %46 = vector.broadcast %45 : vector<1x32xf32> to vector<2x32xf32>
    %47 = arith.addf %44, %46 : vector<2x32xf32>
    %cst_35 = arith.constant 0.000000e+00 : f32
    %48 = vector.broadcast %cst_35 : f32 to vector<2x32xf32>
    %49 = arith.maximumf %47, %48 : vector<2x32xf32>
    %c0_36 = arith.constant 0 : index
    %c0_37 = arith.constant 0 : index
    %50 = vector.load %arg14[%c0_36, %c0_37] : memref<32x1xf32, #tpu.memory_space<vmem>>, vector<32x1xf32>
    %cst_38 = arith.constant dense<0.000000e+00> : vector<2x1xf32>
    %51 = tpu.matmul %49, %50, %cst_38 {dimension_numbers = #tpu.dot_dimension_numbers<[1], [0], [0], [1], [0, 0, 1, 1], [], []>} : vector<2x32xf32>, vector<32x1xf32>, vector<2x1xf32> -> vector<2x1xf32>
    %c0_39 = arith.constant 0 : index
    %c0_40 = arith.constant 0 : index
    %52 = vector.load %arg15[%c0_39, %c0_40] : memref<1x1xf32, #tpu.memory_space<vmem>>, vector<1x1xf32>
    %53 = vector.broadcast %52 : vector<1x1xf32> to vector<2x1xf32>
    %54 = arith.addf %51, %53 : vector<2x1xf32>
    %c0_41 = arith.constant 0 : index
    %c0_42 = arith.constant 0 : index
    %55 = vector.load %arg16[%c0_41, %c0_42] : memref<2x1xf32, #tpu.memory_space<vmem>>, vector<2x1xf32>
    tpu.vector_store %arg16[%c0_41, %c0_42], %54 {strides = array<i32>} : memref<2x1xf32, #tpu.memory_space<vmem>>, vector<2x1xf32>,
    return
  }
}

</mosaic_0001>

<llo_original>
// kernel: rnn_forward.1
$region0: #{rnn_forward.1}
  #allocation0 [shape = 'u32[]', space=smem, size = 0x4, offset = 0x4, fixed_abs, tag = 'smem constant byte address 0x4 - core index']
  #allocation1 [shape = 'u32[144,128]{1,0:T(1,128)}', space=vmem, size = 0x12000, scoped, tag = 'internal scratch']
  #allocation2 [shape = 'f32[56,128]{1,0:T(8,128)}', space=vmem, size = 0x7000, scoped, tag = 'scratch operand']
  #allocation3 [shape = 'f32[1,1]{1,0:T(1,128)S(1)}', space=vmem, size = 0x200, scoped, tag = 'scoped memory for rnn_forward.1']
  %s0 = inlined_call_operand.vmem [shape: f32[56,2], index: 0, kind: input, shape index: {}]
  %s1 = inlined_call_operand.vmem [shape: f32[2,512], index: 1, kind: input, shape index: {}]
  %s2 = inlined_call_operand.vmem [shape: f32[1,512], index: 2, kind: input, shape index: {}]
  %s3 = inlined_call_operand.vmem [shape: f32[512,64], index: 3, kind: input, shape index: {}]
  %s4 = inlined_call_operand.vmem [shape: f32[1,64], index: 4, kind: input, shape index: {}]
  %s5 = inlined_call_operand.vmem [shape: f32[64,128], index: 5, kind: input, shape index: {}]
  %s6 = inlined_call_operand.hbm [shape: f32[32,128], index: 6, kind: input, shape index: {}]
  %s7 = inlined_call_operand.vmem [shape: f32[1,128], index: 7, kind: input, shape index: {}]
  %s8 = inlined_call_operand.hbm [shape: f32[64,128], index: 8, kind: input, shape index: {}]
  %s9 = inlined_call_operand.vmem [shape: f32[1,128], index: 9, kind: input, shape index: {}]
  %s10 = inlined_call_operand.vmem [shape: f32[28,32,64], index: 10, kind: input, shape index: {}]
  %s11 = inlined_call_operand.vmem [shape: f32[1,64], index: 11, kind: input, shape index: {}]
  %s12 = inlined_call_operand.vmem [shape: f32[64,32], index: 12, kind: input, shape index: {}]
  %s13 = inlined_call_operand.vmem [shape: f32[1,32], index: 13, kind: input, shape index: {}]
  %s14 = inlined_call_operand.vmem [shape: f32[32,1], index: 14, kind: input, shape index: {}]
  %s15 = inlined_call_operand.<no memory space> [shape: f32[1,1], index: 15, kind: input, shape index: {}]
  %s16 = inlined_call_operand.vmem [shape: f32[2,1], index: 16, kind: output, shape index: {}]
  %s17 = sld [smem:[#allocation0]]
  $region89: #{rnn_forward.1} parent=0
    _
  %s19 = ssub.s32 1, %s17
  %s20 = scalar_select 0, %s19, %s17
  %v21 = vstv %s15
  %22 = vst [vmem:[#allocation3] sm:$0x1] %v21
  $region1: #{rnn_forward.1} parent=0
    #allocation4 [shape = 'u8[16384]{0}', space=vmem, size = 0x4000, scoped, tag = 'input window, operand 6, single buffered']
    #allocation5 [shape = 's32[1]{0}', space=sflag, size = 0x4, scoped, tag = 'scoped memory for rnn_forward.1']
    #allocation6 [shape = 'u8[32768]{0}', space=vmem, size = 0x8000, scoped, tag = 'input window, operand 8, single buffered']
    #allocation7 [shape = 's32[1]{0}', space=sflag, size = 0x4, scoped, tag = 'scoped memory for rnn_forward.1']
    %23 = vsyncpa [#allocation5], 0
    %24 = vsyncpa [#allocation7], 0
    // Predicated region
    $region2: #{rnn_forward.1} parent=1 // pred_check
      _
    $region3: #{rnn_forward.1} parent=1 // pred_check_branch
      %26 = sbr.rel (0) target = $region5
    $region4: #{rnn_forward.1} parent=1 // pred_region
      _
    $region5: #{rnn_forward.1} parent=1 // pred_fallthru
      _
    // Predicated region
    $region6: #{rnn_forward.1} parent=1 // pred_check
      _
    $region7: #{rnn_forward.1} parent=1 // pred_check_branch
      %28 = sbr.rel (0) target = $region9
    $region8: #{rnn_forward.1} parent=1 // pred_region
      _
    $region9: #{rnn_forward.1} parent=1 // pred_fallthru
      _
    // Predicated region
    $region10: #{rnn_forward.1} parent=1 // pred_check
      _
    $region11: #{rnn_forward.1} parent=1 // pred_check_branch
      %30 = sbr.rel (0) target = $region13
    $region12: #{rnn_forward.1} parent=1 // pred_region
      _
    $region13: #{rnn_forward.1} parent=1 // pred_fallthru
      _
    // Predicated region
    $region14: #{rnn_forward.1} parent=1 // pred_check
      _
    $region15: #{rnn_forward.1} parent=1 // pred_check_branch
      %32 = sbr.rel (0) target = $region17
    $region16: #{rnn_forward.1} parent=1 // pred_region
      _
    $region17: #{rnn_forward.1} parent=1 // pred_fallthru
      _
    // Predicated region
    $region18: #{rnn_forward.1} parent=1 // pred_check
      _
    $region19: #{rnn_forward.1} parent=1 // pred_check_branch
      %34 = sbr.rel (0) target = $region21
    $region20: #{rnn_forward.1} parent=1 // pred_region
      _
    $region21: #{rnn_forward.1} parent=1 // pred_fallthru
      _
    // Predicated region
    $region22: #{rnn_forward.1} parent=1 // pred_check
      _
    $region23: #{rnn_forward.1} parent=1 // pred_check_branch
      %36 = sbr.rel (0) target = $region25
    $region24: #{rnn_forward.1} parent=1 // pred_region
      _
    $region25: #{rnn_forward.1} parent=1 // pred_fallthru
      _
    // Predicated region
    $region26: #{rnn_forward.1} parent=1 // pred_check
      _
    $region27: #{rnn_forward.1} parent=1 // pred_check_branch
      %38 = sbr.rel (0) target = $region29
    $region28: #{rnn_forward.1} parent=1 // pred_region
      %s40 = ssub.s32 512, 512
      %41 = vsyncadd [#allocation5], %s40
      %s42 = sshll.u32 [#allocation4], 4
      %s43 = int_to_ptr.vmem [resolvable:$true] %s42
      %48 = dma.hbm_to_vmem [thread:$0]  %s6, 512, %s43, [#allocation5], 128, 128, 8
    $region29: #{rnn_forward.1} parent=1 // pred_fallthru
      _
    // Predicated region
    $region30: #{rnn_forward.1} parent=1 // pred_check
      _
    $region31: #{rnn_forward.1} parent=1 // pred_check_branch
      %50 = sbr.rel (0) target = $region33
    $region32: #{rnn_forward.1} parent=1 // pred_region
      _
    $region33: #{rnn_forward.1} parent=1 // pred_fallthru
      _
    // Predicated region
    $region34: #{rnn_forward.1} parent=1 // pred_check
      _
    $region35: #{rnn_forward.1} parent=1 // pred_check_branch
      %52 = sbr.rel (0) target = $region37
    $region36: #{rnn_forward.1} parent=1 // pred_region
      %s54 = ssub.s32 1024, 1024
      %55 = vsyncadd [#allocation7], %s54
      %s56 = sshll.u32 [#allocation6], 4
      %s57 = int_to_ptr.vmem [resolvable:$true] %s56
      %62 = dma.hbm_to_vmem [thread:$0]  %s8, 1024, %s57, [#allocation7], 128, 128, 8
    $region37: #{rnn_forward.1} parent=1 // pred_fallthru
      _
    // Predicated region
    $region38: #{rnn_forward.1} parent=1 // pred_check
      _
    $region39: #{rnn_forward.1} parent=1 // pred_check_branch
      %64 = sbr.rel (0) target = $region41
    $region40: #{rnn_forward.1} parent=1 // pred_region
      _
    $region41: #{rnn_forward.1} parent=1 // pred_fallthru
      _
    // Predicated region
    $region42: #{rnn_forward.1} parent=1 // pred_check
      _
    $region43: #{rnn_forward.1} parent=1 // pred_check_branch
      %66 = sbr.rel (0) target = $region45
    $region44: #{rnn_forward.1} parent=1 // pred_region
      _
    $region45: #{rnn_forward.1} parent=1 // pred_fallthru
      _
    // Predicated region
    $region46: #{rnn_forward.1} parent=1 // pred_check
      _
    $region47: #{rnn_forward.1} parent=1 // pred_check_branch
      %68 = sbr.rel (0) target = $region49
    $region48: #{rnn_forward.1} parent=1 // pred_region
      _
    $region49: #{rnn_forward.1} parent=1 // pred_fallthru
      _
    // Predicated region
    $region50: #{rnn_forward.1} parent=1 // pred_check
      _
    $region51: #{rnn_forward.1} parent=1 // pred_check_branch
      %70 = sbr.rel (0) target = $region53
    $region52: #{rnn_forward.1} parent=1 // pred_region
      _
    $region53: #{rnn_forward.1} parent=1 // pred_fallthru
      _
    // Predicated region
    $region54: #{rnn_forward.1} parent=1 // pred_check
      _
    $region55: #{rnn_forward.1} parent=1 // pred_check_branch
      %72 = sbr.rel (0) target = $region57
    $region56: #{rnn_forward.1} parent=1 // pred_region
      _
    $region57: #{rnn_forward.1} parent=1 // pred_fallthru
      _
    // Predicated region
    $region58: #{rnn_forward.1} parent=1 // pred_check
      _
    $region59: #{rnn_forward.1} parent=1 // pred_check_branch
      %74 = sbr.rel (0) target = $region61
    $region60: #{rnn_forward.1} parent=1 // pred_region
      _
    $region61: #{rnn_forward.1} parent=1 // pred_fallthru
      _
    // Predicated region
    $region62: #{rnn_forward.1} parent=1 // pred_check
      _
    $region63: #{rnn_forward.1} parent=1 // pred_check_branch
      %76 = sbr.rel (0) target = $region65
    $region64: #{rnn_forward.1} parent=1 // pred_region
      _
    $region65: #{rnn_forward.1} parent=1 // pred_fallthru
      _
    // Predicated region
    $region66: #{rnn_forward.1} parent=1 // pred_check
      _
    $region67: #{rnn_forward.1} parent=1 // pred_check_branch
      %78 = sbr.rel (0) target = $region69
    $region68: #{rnn_forward.1} parent=1 // pred_region
      %79 = dma.done [#allocation5], 512
    $region69: #{rnn_forward.1} parent=1 // pred_fallthru
      _
    // Predicated region
    $region70: #{rnn_forward.1} parent=1 // pred_check
      _
    $region71: #{rnn_forward.1} parent=1 // pred_check_branch
      %81 = sbr.rel (0) target = $region73
    $region72: #{rnn_forward.1} parent=1 // pred_region
      %82 = dma.done [#allocation7], 1024
    $region73: #{rnn_forward.1} parent=1 // pred_fallthru
      _
    %v83 = vld [vmem:[%s0] sm:$0xff]
    %v84 = vld [vmem:[%s0 + $0x8] sm:$0xff]
    %v85 = vld [vmem:[%s0 + $0x10] sm:$0xff]
    %v86 = vld [vmem:[%s0 + $0x18] sm:$0xff]
    %v87 = vld [vmem:[%s0 + $0x20] sm:$0xff]
    %v88 = vld [vmem:[%s0 + $0x28] sm:$0xff]
    %v89 = vld [vmem:[%s0 + $0x30] sm:$0xff]
    %v90 = vld [vmem:[%s1] sm:$0xff]
    %92 = vset.pattern.permute.xlu0 0
    %93 = vperm.xlu0 %92, %v83
    %v94 = vpop.permute.xlu0 %93
    %97 = vset.pattern.permute.xlu0 0
    %98 = vperm.xlu0 %97, %v84
    %v99 = vpop.permute.xlu0 %98
    %102 = vset.pattern.permute.xlu0 0
    %103 = vperm.xlu0 %102, %v85
    %v104 = vpop.permute.xlu0 %103
    %107 = vset.pattern.permute.xlu0 0
    %108 = vperm.xlu0 %107, %v86
    %v109 = vpop.permute.xlu0 %108
    %112 = vset.pattern.permute.xlu0 0
    %113 = vperm.xlu0 %112, %v87
    %v114 = vpop.permute.xlu0 %113
    %117 = vset.pattern.permute.xlu0 0
    %118 = vperm.xlu0 %117, %v88
    %v119 = vpop.permute.xlu0 %118
    %122 = vset.pattern.permute.xlu0 0
    %123 = vperm.xlu0 %122, %v89
    %v124 = vpop.permute.xlu0 %123
    %v127 = vlaneseq
    %v128 = vshrl.u32 %v127, 7
    %v129 = vsub.s32 0, %v128
    %v130 = vrot.slane %v90, %v129
    %v131 = vlaneseq
    %v132 = vshrl.u32 %v131, 7
    %v133 = vsub.s32 2, %v132
    %v134 = vrot.slane %v90, %v133
    %v135 = vlaneseq
    %v136 = vshrl.u32 %v135, 7
    %v137 = vsub.s32 4, %v136
    %v138 = vrot.slane %v90, %v137
    %v139 = vlaneseq
    %v140 = vshrl.u32 %v139, 7
    %v141 = vsub.s32 6, %v140
    %v142 = vrot.slane %v90, %v141
    %v147 = vlaneseq
    %v148 = vshrl.u32 %v147, 7
    %v149 = vsub.s32 0, %v148
    %v150 = vrot.slane %v130, %v149
    %v151 = vlaneseq
    %v152 = vshrl.u32 %v151, 7
    %v153 = vsub.s32 0, %v152
    %v154 = vrot.slane %v134, %v153
    %v155 = vlaneseq
    %v156 = vshrl.u32 %v155, 7
    %v157 = vsub.s32 0, %v156
    %v158 = vrot.slane %v138, %v157
    %v159 = vlaneseq
    %v160 = vshrl.u32 %v159, 7
    %v161 = vsub.s32 0, %v160
    %v162 = vrot.slane %v142, %v161
    %v163 = vmul.f32 %v94, %v150
    %v164 = vmul.f32 %v94, %v154
    %v165 = vmul.f32 %v94, %v158
    %v166 = vmul.f32 %v94, %v162
    %v167 = vmul.f32 %v99, %v150
    %v168 = vmul.f32 %v99, %v154
    %v169 = vmul.f32 %v99, %v158
    %v170 = vmul.f32 %v99, %v162
    %v171 = vmul.f32 %v104, %v150
    %v172 = vmul.f32 %v104, %v154
    %v173 = vmul.f32 %v104, %v158
    %v174 = vmul.f32 %v104, %v162
    %v175 = vmul.f32 %v109, %v150
    %v176 = vmul.f32 %v109, %v154
    %v177 = vmul.f32 %v109, %v158
    %v178 = vmul.f32 %v109, %v162
    %v179 = vmul.f32 %v114, %v150
    %v180 = vmul.f32 %v114, %v154
    %v181 = vmul.f32 %v114, %v158
    %v182 = vmul.f32 %v114, %v162
    %v183 = vmul.f32 %v119, %v150
    %v184 = vmul.f32 %v119, %v154
    %v185 = vmul.f32 %v119, %v158
    %v186 = vmul.f32 %v119, %v162
    %v187 = vmul.f32 %v124, %v150
    %v188 = vmul.f32 %v124, %v154
    %v189 = vmul.f32 %v124, %v158
    %v190 = vmul.f32 %v124, %v162
    %191 = vset.pattern.permute.xlu0 1
    %192 = vperm.xlu0 %191, %v83
    %v193 = vpop.permute.xlu0 %192
    %195 = vset.pattern.permute.xlu0 1
    %196 = vperm.xlu0 %195, %v84
    %v197 = vpop.permute.xlu0 %196
    %199 = vset.pattern.permute.xlu0 1
    %200 = vperm.xlu0 %199, %v85
    %v201 = vpop.permute.xlu0 %200
    %203 = vset.pattern.permute.xlu0 1
    %204 = vperm.xlu0 %203, %v86
    %v205 = vpop.permute.xlu0 %204
    %207 = vset.pattern.permute.xlu0 1
    %208 = vperm.xlu0 %207, %v87
    %v209 = vpop.permute.xlu0 %208
    %211 = vset.pattern.permute.xlu0 1
    %212 = vperm.xlu0 %211, %v88
    %v213 = vpop.permute.xlu0 %212
    %215 = vset.pattern.permute.xlu0 1
    %216 = vperm.xlu0 %215, %v89
    %v217 = vpop.permute.xlu0 %216
    %v219 = vlaneseq
    %v220 = vshrl.u32 %v219, 7
    %v221 = vsub.s32 1, %v220
    %v222 = vrot.slane %v90, %v221
    %v223 = vlaneseq
    %v224 = vshrl.u32 %v223, 7
    %v225 = vsub.s32 3, %v224
    %v226 = vrot.slane %v90, %v225
    %v227 = vlaneseq
    %v228 = vshrl.u32 %v227, 7
    %v229 = vsub.s32 5, %v228
    %v230 = vrot.slane %v90, %v229
    %v231 = vlaneseq
    %v232 = vshrl.u32 %v231, 7
    %v233 = vsub.s32 7, %v232
    %v234 = vrot.slane %v90, %v233
    %v239 = vlaneseq
    %v240 = vshrl.u32 %v239, 7
    %v241 = vsub.s32 1, %v240
    %v242 = vrot.slane %v222, %v241
    %v243 = vlaneseq
    %v244 = vshrl.u32 %v243, 7
    %v245 = vsub.s32 1, %v244
    %v246 = vrot.slane %v226, %v245
    %v247 = vlaneseq
    %v248 = vshrl.u32 %v247, 7
    %v249 = vsub.s32 1, %v248
    %v250 = vrot.slane %v230, %v249
    %v251 = vlaneseq
    %v252 = vshrl.u32 %v251, 7
    %v253 = vsub.s32 1, %v252
    %v254 = vrot.slane %v234, %v253
    %v255 = vmul.f32 %v193, %v242
    %v256 = vmul.f32 %v193, %v246
    %v257 = vmul.f32 %v193, %v250
    %v258 = vmul.f32 %v193, %v254
    %v259 = vmul.f32 %v197, %v242
    %v260 = vmul.f32 %v197, %v246
    %v261 = vmul.f32 %v197, %v250
    %v262 = vmul.f32 %v197, %v254
    %v263 = vmul.f32 %v201, %v242
    %v264 = vmul.f32 %v201, %v246
    %v265 = vmul.f32 %v201, %v250
    %v266 = vmul.f32 %v201, %v254
    %v267 = vmul.f32 %v205, %v242
    %v268 = vmul.f32 %v205, %v246
    %v269 = vmul.f32 %v205, %v250
    %v270 = vmul.f32 %v205, %v254
    %v271 = vmul.f32 %v209, %v242
    %v272 = vmul.f32 %v209, %v246
    %v273 = vmul.f32 %v209, %v250
    %v274 = vmul.f32 %v209, %v254
    %v275 = vmul.f32 %v213, %v242
    %v276 = vmul.f32 %v213, %v246
    %v277 = vmul.f32 %v213, %v250
    %v278 = vmul.f32 %v213, %v254
    %v279 = vmul.f32 %v217, %v242
    %v280 = vmul.f32 %v217, %v246
    %v281 = vmul.f32 %v217, %v250
    %v282 = vmul.f32 %v217, %v254
    %v283 = vadd.f32 %v163, %v255
    %v284 = vadd.f32 %v164, %v256
    %v285 = vadd.f32 %v165, %v257
    %v286 = vadd.f32 %v166, %v258
    %v287 = vadd.f32 %v167, %v259
    %v288 = vadd.f32 %v168, %v260
    %v289 = vadd.f32 %v169, %v261
    %v290 = vadd.f32 %v170, %v262
    %v291 = vadd.f32 %v171, %v263
    %v292 = vadd.f32 %v172, %v264
    %v293 = vadd.f32 %v173, %v265
    %v294 = vadd.f32 %v174, %v266
    %v295 = vadd.f32 %v175, %v267
    %v296 = vadd.f32 %v176, %v268
    %v297 = vadd.f32 %v177, %v269
    %v298 = vadd.f32 %v178, %v270
    %v299 = vadd.f32 %v179, %v271
    %v300 = vadd.f32 %v180, %v272
    %v301 = vadd.f32 %v181, %v273
    %v302 = vadd.f32 %v182, %v274
    %v303 = vadd.f32 %v183, %v275
    %v304 = vadd.f32 %v184, %v276
    %v305 = vadd.f32 %v185, %v277
    %v306 = vadd.f32 %v186, %v278
    %v307 = vadd.f32 %v187, %v279
    %v308 = vadd.f32 %v188, %v280
    %v309 = vadd.f32 %v189, %v281
    %v310 = vadd.f32 %v190, %v282
    %v311 = vld [vmem:[%s2] sm:$0xf]
    %v313 = vlaneseq
    %v314 = vshrl.u32 %v313, 7
    %v315 = vsub.s32 0, %v314
    %v316 = vrot.slane %v311, %v315
    %v317 = vlaneseq
    %v318 = vshrl.u32 %v317, 7
    %v319 = vsub.s32 1, %v318
    %v320 = vrot.slane %v311, %v319
    %v321 = vlaneseq
    %v322 = vshrl.u32 %v321, 7
    %v323 = vsub.s32 2, %v322
    %v324 = vrot.slane %v311, %v323
    %v325 = vlaneseq
    %v326 = vshrl.u32 %v325, 7
    %v327 = vsub.s32 3, %v326
    %v328 = vrot.slane %v311, %v327
    %v333 = vadd.f32 %v283, %v316
    %v334 = vadd.f32 %v284, %v320
    %v335 = vadd.f32 %v285, %v324
    %v336 = vadd.f32 %v286, %v328
    %v337 = vadd.f32 %v287, %v316
    %v338 = vadd.f32 %v288, %v320
    %v339 = vadd.f32 %v289, %v324
    %v340 = vadd.f32 %v290, %v328
    %v341 = vadd.f32 %v291, %v316
    %v342 = vadd.f32 %v292, %v320
    %v343 = vadd.f32 %v293, %v324
    %v344 = vadd.f32 %v294, %v328
    %v345 = vadd.f32 %v295, %v316
    %v346 = vadd.f32 %v296, %v320
    %v347 = vadd.f32 %v297, %v324
    %v348 = vadd.f32 %v298, %v328
    %v349 = vadd.f32 %v299, %v316
    %v350 = vadd.f32 %v300, %v320
    %v351 = vadd.f32 %v301, %v324
    %v352 = vadd.f32 %v302, %v328
    %v353 = vadd.f32 %v303, %v316
    %v354 = vadd.f32 %v304, %v320
    %v355 = vadd.f32 %v305, %v324
    %v356 = vadd.f32 %v306, %v328
    %v357 = vadd.f32 %v307, %v316
    %v358 = vadd.f32 %v308, %v320
    %v359 = vadd.f32 %v309, %v324
    %v360 = vadd.f32 %v310, %v328
    %v361 = vmax.f32 %v333, 0.0
    %v362 = vmax.f32 %v334, 0.0
    %v363 = vmax.f32 %v335, 0.0
    %v364 = vmax.f32 %v336, 0.0
    %v365 = vmax.f32 %v337, 0.0
    %v366 = vmax.f32 %v338, 0.0
    %v367 = vmax.f32 %v339, 0.0
    %v368 = vmax.f32 %v340, 0.0
    %v369 = vmax.f32 %v341, 0.0
    %v370 = vmax.f32 %v342, 0.0
    %v371 = vmax.f32 %v343, 0.0
    %v372 = vmax.f32 %v344, 0.0
    %v373 = vmax.f32 %v345, 0.0
    %v374 = vmax.f32 %v346, 0.0
    %v375 = vmax.f32 %v347, 0.0
    %v376 = vmax.f32 %v348, 0.0
    %v377 = vmax.f32 %v349, 0.0
    %v378 = vmax.f32 %v350, 0.0
    %v379 = vmax.f32 %v351, 0.0
    %v380 = vmax.f32 %v352, 0.0
    %v381 = vmax.f32 %v353, 0.0
    %v382 = vmax.f32 %v354, 0.0
    %v383 = vmax.f32 %v355, 0.0
    %v384 = vmax.f32 %v356, 0.0
    %v385 = vmax.f32 %v357, 0.0
    %v386 = vmax.f32 %v358, 0.0
    %v387 = vmax.f32 %v359, 0.0
    %v388 = vmax.f32 %v360, 0.0
    %v389 = vld [vmem:[%s3] sm:$0xff]
    %v390 = vld [vmem:[%s3 + $0x8] sm:$0xff]
    %v391 = vld [vmem:[%s3 + $0x10] sm:$0xff]
    %v392 = vld [vmem:[%s3 + $0x18] sm:$0xff]
    %v393 = vld [vmem:[%s3 + $0x20] sm:$0xff]
    %v394 = vld [vmem:[%s3 + $0x28] sm:$0xff]
    %v395 = vld [vmem:[%s3 + $0x30] sm:$0xff]
    %v396 = vld [vmem:[%s3 + $0x38] sm:$0xff]
    %v397 = vld [vmem:[%s3 + $0x40] sm:$0xff]
    %v398 = vld [vmem:[%s3 + $0x48] sm:$0xff]
    %v399 = vld [vmem:[%s3 + $0x50] sm:$0xff]
    %v400 = vld [vmem:[%s3 + $0x58] sm:$0xff]
    %v401 = vld [vmem:[%s3 + $0x60] sm:$0xff]
    %v402 = vld [vmem:[%s3 + $0x68] sm:$0xff]
    %v403 = vld [vmem:[%s3 + $0x70] sm:$0xff]
    %v404 = vld [vmem:[%s3 + $0x78] sm:$0xff]
    %v405 = vld [vmem:[%s3 + $0x80] sm:$0xff]
    %v406 = vld [vmem:[%s3 + $0x88] sm:$0xff]
    %v407 = vld [vmem:[%s3 + $0x90] sm:$0xff]
    %v408 = vld [vmem:[%s3 + $0x98] sm:$0xff]
    %v409 = vld [vmem:[%s3 + $0xa0] sm:$0xff]
    %v410 = vld [vmem:[%s3 + $0xa8] sm:$0xff]
    %v411 = vld [vmem:[%s3 + $0xb0] sm:$0xff]
    %v412 = vld [vmem:[%s3 + $0xb8] sm:$0xff]
    %v413 = vld [vmem:[%s3 + $0xc0] sm:$0xff]
    %v414 = vld [vmem:[%s3 + $0xc8] sm:$0xff]
    %v415 = vld [vmem:[%s3 + $0xd0] sm:$0xff]
    %v416 = vld [vmem:[%s3 + $0xd8] sm:$0xff]
    %v417 = vld [vmem:[%s3 + $0xe0] sm:$0xff]
    %v418 = vld [vmem:[%s3 + $0xe8] sm:$0xff]
    %v419 = vld [vmem:[%s3 + $0xf0] sm:$0xff]
    %v420 = vld [vmem:[%s3 + $0xf8] sm:$0xff]
    %v421 = vld [vmem:[%s3 + $0x100] sm:$0xff]
    %v422 = vld [vmem:[%s3 + $0x108] sm:$0xff]
    %v423 = vld [vmem:[%s3 + $0x110] sm:$0xff]
    %v424 = vld [vmem:[%s3 + $0x118] sm:$0xff]
    %v425 = vld [vmem:[%s3 + $0x120] sm:$0xff]
    %v426 = vld [vmem:[%s3 + $0x128] sm:$0xff]
    %v427 = vld [vmem:[%s3 + $0x130] sm:$0xff]
    %v428 = vld [vmem:[%s3 + $0x138] sm:$0xff]
    %v429 = vld [vmem:[%s3 + $0x140] sm:$0xff]
    %v430 = vld [vmem:[%s3 + $0x148] sm:$0xff]
    %v431 = vld [vmem:[%s3 + $0x150] sm:$0xff]
    %v432 = vld [vmem:[%s3 + $0x158] sm:$0xff]
    %v433 = vld [vmem:[%s3 + $0x160] sm:$0xff]
    %v434 = vld [vmem:[%s3 + $0x168] sm:$0xff]
    %v435 = vld [vmem:[%s3 + $0x170] sm:$0xff]
    %v436 = vld [vmem:[%s3 + $0x178] sm:$0xff]
    %v437 = vld [vmem:[%s3 + $0x180] sm:$0xff]
    %v438 = vld [vmem:[%s3 + $0x188] sm:$0xff]
    %v439 = vld [vmem:[%s3 + $0x190] sm:$0xff]
    %v440 = vld [vmem:[%s3 + $0x198] sm:$0xff]
    %v441 = vld [vmem:[%s3 + $0x1a0] sm:$0xff]
    %v442 = vld [vmem:[%s3 + $0x1a8] sm:$0xff]
    %v443 = vld [vmem:[%s3 + $0x1b0] sm:$0xff]
    %v444 = vld [vmem:[%s3 + $0x1b8] sm:$0xff]
    %v445 = vld [vmem:[%s3 + $0x1c0] sm:$0xff]
    %v446 = vld [vmem:[%s3 + $0x1c8] sm:$0xff]
    %v447 = vld [vmem:[%s3 + $0x1d0] sm:$0xff]
    %v448 = vld [vmem:[%s3 + $0x1d8] sm:$0xff]
    %v449 = vld [vmem:[%s3 + $0x1e0] sm:$0xff]
    %v450 = vld [vmem:[%s3 + $0x1e8] sm:$0xff]
    %v451 = vld [vmem:[%s3 + $0x1f0] sm:$0xff]
    %v452 = vld [vmem:[%s3 + $0x1f8] sm:$0xff]
    %v453 = vld [vmem:[%s4] sm:$0x1]
    %v455 = vlaneseq
    %v456 = vshrl.u32 %v455, 7
    %v457 = vsub.s32 0, %v456
    %v458 = vrot.slane %v453, %v457
    %460 = vmatprep.subr.mxu0 0.0
    %461 = vmatpush1.msra.mxu0 %v404
    %462 = vmatprep.subr.mxu0 0.0
    %463 = vmatpush1.msra.mxu0 %v403
    %464 = vmatprep.subr.mxu0 0.0
    %465 = vmatpush1.msra.mxu0 %v402
    %466 = vmatprep.subr.mxu0 0.0
    %467 = vmatpush1.msra.mxu0 %v401
    %468 = vmatprep.subr.mxu0 0.0
    %469 = vmatpush1.msra.mxu0 %v400
    %470 = vmatprep.subr.mxu0 0.0
    %471 = vmatpush1.msra.mxu0 %v399
    %472 = vmatprep.subr.mxu0 0.0
    %473 = vmatpush1.msra.mxu0 %v398
    %474 = vmatprep.subr.mxu0 0.0
    %475 = vmatpush1.msra.mxu0 %v397
    %476 = vmatprep.subr.mxu0 0.0
    %477 = vmatpush1.msra.mxu0 %v396
    %478 = vmatprep.subr.mxu0 0.0
    %479 = vmatpush1.msra.mxu0 %v395
    %480 = vmatprep.subr.mxu0 0.0
    %481 = vmatpush1.msra.mxu0 %v394
    %482 = vmatprep.subr.mxu0 0.0
    %483 = vmatpush1.msra.mxu0 %v393
    %484 = vmatprep.subr.mxu0 0.0
    %485 = vmatpush1.msra.mxu0 %v392
    %486 = vmatprep.subr.mxu0 0.0
    %487 = vmatpush1.msra.mxu0 %v391
    %488 = vmatprep.subr.mxu0 0.0
    %489 = vmatpush1.msra.mxu0 %v390
    %490 = vmatprep.subr.mxu0 0.0
    %491 = vmatpush1.msra.mxu0 %v389
    %492 = vmatprep.subr.mxu0 0.0
    %493 = vmatpush2.msra.mxu0 %v420
    %494 = vmatprep.subr.mxu0 0.0
    %495 = vmatpush2.msra.mxu0 %v419
    %496 = vmatprep.subr.mxu0 0.0
    %497 = vmatpush2.msra.mxu0 %v418
    %498 = vmatprep.subr.mxu0 0.0
    %499 = vmatpush2.msra.mxu0 %v417
    %500 = vmatprep.subr.mxu0 0.0
    %501 = vmatpush2.msra.mxu0 %v416
    %502 = vmatprep.subr.mxu0 0.0
    %503 = vmatpush2.msra.mxu0 %v415
    %504 = vmatprep.subr.mxu0 0.0
    %505 = vmatpush2.msra.mxu0 %v414
    %506 = vmatprep.subr.mxu0 0.0
    %507 = vmatpush2.msra.mxu0 %v413
    %508 = vmatprep.subr.mxu0 0.0
    %509 = vmatpush2.msra.mxu0 %v412
    %510 = vmatprep.subr.mxu0 0.0
    %511 = vmatpush2.msra.mxu0 %v411
    %512 = vmatprep.subr.mxu0 0.0
    %513 = vmatpush2.msra.mxu0 %v410
    %514 = vmatprep.subr.mxu0 0.0
    %515 = vmatpush2.msra.mxu0 %v409
    %516 = vmatprep.subr.mxu0 0.0
    %517 = vmatpush2.msra.mxu0 %v408
    %518 = vmatprep.subr.mxu0 0.0
    %519 = vmatpush2.msra.mxu0 %v407
    %520 = vmatprep.subr.mxu0 0.0
    %521 = vmatpush2.msra.mxu0 %v406
    %522 = vmatprep.subr.mxu0 0.0
    %523 = vmatpush2.msra.mxu0 %v405
    %524 = vmatprep.mubr.f32.mxu0 %v362
    %525 = vmatmul.mubr.f32.gmra.mxu0 %v361
    %v526 = vpop.f32.mrf.mxu0
    %v527 = vadd.f32 %v458, %v526
    %v528 = vpop.f32.mrf.mxu0
    %529 = vmatprep.mubr.f32.mxu0 %v366
    %530 = vmatmul.mubr.f32.gmra.mxu0 %v365
    %v531 = vpop.f32.mrf.mxu0
    %v532 = vadd.f32 %v458, %v531
    %v533 = vpop.f32.mrf.mxu0
    %534 = vmatprep.mubr.f32.mxu0 %v370
    %535 = vmatmul.mubr.f32.gmra.mxu0 %v369
    %v536 = vpop.f32.mrf.mxu0
    %v537 = vadd.f32 %v458, %v536
    %v538 = vpop.f32.mrf.mxu0
    %539 = vmatprep.mubr.f32.mxu0 %v374
    %540 = vmatmul.mubr.f32.gmra.mxu0 %v373
    %v541 = vpop.f32.mrf.mxu0
    %v542 = vadd.f32 %v458, %v541
    %v543 = vpop.f32.mrf.mxu0
    %544 = vmatprep.mubr.f32.mxu0 %v378
    %545 = vmatmul.mubr.f32.gmra.mxu0 %v377
    %v546 = vpop.f32.mrf.mxu0
    %v547 = vadd.f32 %v458, %v546
    %v548 = vpop.f32.mrf.mxu0
    %549 = vmatprep.mubr.f32.mxu0 %v382
    %550 = vmatmul.mubr.f32.gmra.mxu0 %v381
    %v551 = vpop.f32.mrf.mxu0
    %v552 = vadd.f32 %v458, %v551
    %v553 = vpop.f32.mrf.mxu0
    %554 = vmatprep.mubr.f32.mxu0 %v386
    %555 = vmatmul.mubr.f32.gmra.mxu0 %v385
    %v556 = vpop.f32.mrf.mxu0
    %v557 = vadd.f32 %v458, %v556
    %v558 = vpop.f32.mrf.mxu0
    %559 = vdwg.mxu0
    %560 = vmatprep.subr.mxu0 0.0
    %561 = vmatpush1.msra.mxu0 %v436
    %562 = vmatprep.subr.mxu0 0.0
    %563 = vmatpush1.msra.mxu0 %v435
    %564 = vmatprep.subr.mxu0 0.0
    %565 = vmatpush1.msra.mxu0 %v434
    %566 = vmatprep.subr.mxu0 0.0
    %567 = vmatpush1.msra.mxu0 %v433
    %568 = vmatprep.subr.mxu0 0.0
    %569 = vmatpush1.msra.mxu0 %v432
    %570 = vmatprep.subr.mxu0 0.0
    %571 = vmatpush1.msra.mxu0 %v431
    %572 = vmatprep.subr.mxu0 0.0
    %573 = vmatpush1.msra.mxu0 %v430
    %574 = vmatprep.subr.mxu0 0.0
    %575 = vmatpush1.msra.mxu0 %v429
    %576 = vmatprep.subr.mxu0 0.0
    %577 = vmatpush1.msra.mxu0 %v428
    %578 = vmatprep.subr.mxu0 0.0
    %579 = vmatpush1.msra.mxu0 %v427
    %580 = vmatprep.subr.mxu0 0.0
    %581 = vmatpush1.msra.mxu0 %v426
    %582 = vmatprep.subr.mxu0 0.0
    %583 = vmatpush1.msra.mxu0 %v425
    %584 = vmatprep.subr.mxu0 0.0
    %585 = vmatpush1.msra.mxu0 %v424
    %586 = vmatprep.subr.mxu0 0.0
    %587 = vmatpush1.msra.mxu0 %v423
    %588 = vmatprep.subr.mxu0 0.0
    %589 = vmatpush1.msra.mxu0 %v422
    %590 = vmatprep.subr.mxu0 0.0
    %591 = vmatpush1.msra.mxu0 %v421
    %592 = vmatprep.subr.mxu0 0.0
    %593 = vmatpush2.msra.mxu0 %v452
    %594 = vmatprep.subr.mxu0 0.0
    %595 = vmatpush2.msra.mxu0 %v451
    %596 = vmatprep.subr.mxu0 0.0
    %597 = vmatpush2.msra.mxu0 %v450
    %598 = vmatprep.subr.mxu0 0.0
    %599 = vmatpush2.msra.mxu0 %v449
    %600 = vmatprep.subr.mxu0 0.0
    %601 = vmatpush2.msra.mxu0 %v448
    %602 = vmatprep.subr.mxu0 0.0
    %603 = vmatpush2.msra.mxu0 %v447
    %604 = vmatprep.subr.mxu0 0.0
    %605 = vmatpush2.msra.mxu0 %v446
    %606 = vmatprep.subr.mxu0 0.0
    %607 = vmatpush2.msra.mxu0 %v445
    %608 = vmatprep.subr.mxu0 0.0
    %609 = vmatpush2.msra.mxu0 %v444
    %610 = vmatprep.subr.mxu0 0.0
    %611 = vmatpush2.msra.mxu0 %v443
    %612 = vmatprep.subr.mxu0 0.0
    %613 = vmatpush2.msra.mxu0 %v442
    %614 = vmatprep.subr.mxu0 0.0
    %615 = vmatpush2.msra.mxu0 %v441
    %616 = vmatprep.subr.mxu0 0.0
    %617 = vmatpush2.msra.mxu0 %v440
    %618 = vmatprep.subr.mxu0 0.0
    %619 = vmatpush2.msra.mxu0 %v439
    %620 = vmatprep.subr.mxu0 0.0
    %621 = vmatpush2.msra.mxu0 %v438
    %622 = vmatprep.subr.mxu0 0.0
    %623 = vmatpush2.msra.mxu0 %v437
    %624 = vmatprep.mubr.f32.mxu0 %v364
    %625 = vmatmul.mubr.f32.gmra.mxu0 %v363
    %v626 = vpop.f32.mrf.mxu0
    %v627 = vadd.f32 %v527, %v626
    %v628 = vpop.f32.mrf.mxu0
    %629 = vmatprep.mubr.f32.mxu0 %v368
    %630 = vmatmul.mubr.f32.gmra.mxu0 %v367
    %v631 = vpop.f32.mrf.mxu0
    %v632 = vadd.f32 %v532, %v631
    %v633 = vpop.f32.mrf.mxu0
    %634 = vmatprep.mubr.f32.mxu0 %v372
    %635 = vmatmul.mubr.f32.gmra.mxu0 %v371
    %v636 = vpop.f32.mrf.mxu0
    %v637 = vadd.f32 %v537, %v636
    %v638 = vpop.f32.mrf.mxu0
    %639 = vmatprep.mubr.f32.mxu0 %v376
    %640 = vmatmul.mubr.f32.gmra.mxu0 %v375
    %v641 = vpop.f32.mrf.mxu0
    %v642 = vadd.f32 %v542, %v641
    %v643 = vpop.f32.mrf.mxu0
    %644 = vmatprep.mubr.f32.mxu0 %v380
    %645 = vmatmul.mubr.f32.gmra.mxu0 %v379
    %v646 = vpop.f32.mrf.mxu0
    %v647 = vadd.f32 %v547, %v646
    %v648 = vpop.f32.mrf.mxu0
    %649 = vmatprep.mubr.f32.mxu0 %v384
    %650 = vmatmul.mubr.f32.gmra.mxu0 %v383
    %v651 = vpop.f32.mrf.mxu0
    %v652 = vadd.f32 %v552, %v651
    %v653 = vpop.f32.mrf.mxu0
    %654 = vmatprep.mubr.f32.mxu0 %v388
    %655 = vmatmul.mubr.f32.gmra.mxu0 %v387
    %v656 = vpop.f32.mrf.mxu0
    %v657 = vadd.f32 %v557, %v656
    %v658 = vpop.f32.mrf.mxu0
    %659 = vdwg.mxu0
    %v660 = vmax.f32 %v627, 0.0
    %v661 = vmax.f32 %v632, 0.0
    %v662 = vmax.f32 %v637, 0.0
    %v663 = vmax.f32 %v642, 0.0
    %v664 = vmax.f32 %v647, 0.0
    %v665 = vmax.f32 %v652, 0.0
    %v666 = vmax.f32 %v657, 0.0
    %v667 = vld [vmem:[%s5] sm:$0xff]
    %v668 = vld [vmem:[%s5 + $0x8] sm:$0xff]
    %v669 = vld [vmem:[%s5 + $0x10] sm:$0xff]
    %v670 = vld [vmem:[%s5 + $0x18] sm:$0xff]
    %v671 = vld [vmem:[%s5 + $0x20] sm:$0xff]
    %v672 = vld [vmem:[%s5 + $0x28] sm:$0xff]
    %v673 = vld [vmem:[%s5 + $0x30] sm:$0xff]
    %v674 = vld [vmem:[%s5 + $0x38] sm:$0xff]
    %v675 = vld [vmem:[%s7] sm:$0x1]
    %v677 = vlaneseq
    %v678 = vshrl.u32 %v677, 7
    %v679 = vsub.s32 0, %v678
    %v680 = vrot.slane %v675, %v679
    %vm682 = vcmask 523264
    %v684 = vsel %vm682, %v660, 0
    %v687 = vsel %vm682, %v661, 0
    %v690 = vsel %vm682, %v662, 0
    %v693 = vsel %vm682, %v663, 0
    %v696 = vsel %vm682, %v664, 0
    %v699 = vsel %vm682, %v665, 0
    %v702 = vsel %vm682, %v666, 0
    %704 = vmatprep.subr.mxu0 0.0
    %705 = vmatpush1.msra.mxu0 0.0
    %706 = vmatprep.subr.mxu0 0.0
    %707 = vmatpush1.msra.mxu0 0.0
    %708 = vmatprep.subr.mxu0 0.0
    %709 = vmatpush1.msra.mxu0 0.0
    %710 = vmatprep.subr.mxu0 0.0
    %711 = vmatpush1.msra.mxu0 0.0
    %712 = vmatprep.subr.mxu0 0.0
    %713 = vmatpush1.msra.mxu0 0.0
    %714 = vmatprep.subr.mxu0 0.0
    %715 = vmatpush1.msra.mxu0 0.0
    %716 = vmatprep.subr.mxu0 0.0
    %717 = vmatpush1.msra.mxu0 0.0
    %718 = vmatprep.subr.mxu0 0.0
    %719 = vmatpush1.msra.mxu0 0.0
    %720 = vmatprep.subr.mxu0 0.0
    %721 = vmatpush1.msra.mxu0 %v674
    %722 = vmatprep.subr.mxu0 0.0
    %723 = vmatpush1.msra.mxu0 %v673
    %724 = vmatprep.subr.mxu0 0.0
    %725 = vmatpush1.msra.mxu0 %v672
    %726 = vmatprep.subr.mxu0 0.0
    %727 = vmatpush1.msra.mxu0 %v671
    %728 = vmatprep.subr.mxu0 0.0
    %729 = vmatpush1.msra.mxu0 %v670
    %730 = vmatprep.subr.mxu0 0.0
    %731 = vmatpush1.msra.mxu0 %v669
    %732 = vmatprep.subr.mxu0 0.0
    %733 = vmatpush1.msra.mxu0 %v668
    %734 = vmatprep.subr.mxu0 0.0
    %735 = vmatpush1.msra.mxu0 %v667
    %736 = vmatprep.subr.mxu0 0.0
    %737 = vmatpush2.msra.mxu0 0.0
    %738 = vmatprep.subr.mxu0 0.0
    %739 = vmatpush2.msra.mxu0 0.0
    %740 = vmatprep.subr.mxu0 0.0
    %741 = vmatpush2.msra.mxu0 0.0
    %742 = vmatprep.subr.mxu0 0.0
    %743 = vmatpush2.msra.mxu0 0.0
    %744 = vmatprep.subr.mxu0 0.0
    %745 = vmatpush2.msra.mxu0 0.0
    %746 = vmatprep.subr.mxu0 0.0
    %747 = vmatpush2.msra.mxu0 0.0
    %748 = vmatprep.subr.mxu0 0.0
    %749 = vmatpush2.msra.mxu0 0.0
    %750 = vmatprep.subr.mxu0 0.0
    %751 = vmatpush2.msra.mxu0 0.0
    %752 = vmatprep.subr.mxu0 0.0
    %753 = vmatpush2.msra.mxu0 0.0
    %754 = vmatprep.subr.mxu0 0.0
    %755 = vmatpush2.msra.mxu0 0.0
    %756 = vmatprep.subr.mxu0 0.0
    %757 = vmatpush2.msra.mxu0 0.0
    %758 = vmatprep.subr.mxu0 0.0
    %759 = vmatpush2.msra.mxu0 0.0
    %760 = vmatprep.subr.mxu0 0.0
    %761 = vmatpush2.msra.mxu0 0.0
    %762 = vmatprep.subr.mxu0 0.0
    %763 = vmatpush2.msra.mxu0 0.0
    %764 = vmatprep.subr.mxu0 0.0
    %765 = vmatpush2.msra.mxu0 0.0
    %766 = vmatprep.subr.mxu0 0.0
    %767 = vmatpush2.msra.mxu0 0.0
    %768 = vmatprep.mubr.f32.mxu0 0.0
    %769 = vmatmul.mubr.f32.gmra.mxu0 %v684
    %v770 = vpop.f32.mrf.mxu0
    %v771 = vadd.f32 %v680, %v770
    %v772 = vpop.f32.mrf.mxu0
    %773 = vmatprep.mubr.f32.mxu0 0.0
    %774 = vmatmul.mubr.f32.gmra.mxu0 %v687
    %v775 = vpop.f32.mrf.mxu0
    %v776 = vadd.f32 %v680, %v775
    %v777 = vpop.f32.mrf.mxu0
    %778 = vmatprep.mubr.f32.mxu0 0.0
    %779 = vmatmul.mubr.f32.gmra.mxu0 %v690
    %v780 = vpop.f32.mrf.mxu0
    %v781 = vadd.f32 %v680, %v780
    %v782 = vpop.f32.mrf.mxu0
    %783 = vmatprep.mubr.f32.mxu0 0.0
    %784 = vmatmul.mubr.f32.gmra.mxu0 %v693
    %v785 = vpop.f32.mrf.mxu0
    %v786 = vadd.f32 %v680, %v785
    %v787 = vpop.f32.mrf.mxu0
    %788 = vmatprep.mubr.f32.mxu0 0.0
    %789 = vmatmul.mubr.f32.gmra.mxu0 %v696
    %v790 = vpop.f32.mrf.mxu0
    %v791 = vadd.f32 %v680, %v790
    %v792 = vpop.f32.mrf.mxu0
    %793 = vmatprep.mubr.f32.mxu0 0.0
    %794 = vmatmul.mubr.f32.gmra.mxu0 %v699
    %v795 = vpop.f32.mrf.mxu0
    %v796 = vadd.f32 %v680, %v795
    %v797 = vpop.f32.mrf.mxu0
    %798 = vmatprep.mubr.f32.mxu0 0.0
    %799 = vmatmul.mubr.f32.gmra.mxu0 %v702
    %v800 = vpop.f32.mrf.mxu0
    %v801 = vadd.f32 %v680, %v800
    %v802 = vpop.f32.mrf.mxu0
    %803 = vdwg.mxu0
    %804 = vst [vmem:[#allocation2] sm:$0xff] %v771
    %805 = vst [vmem:[#allocation2 + $0x8] sm:$0xff] %v776
    %806 = vst [vmem:[#allocation2 + $0x10] sm:$0xff] %v781
    %807 = vst [vmem:[#allocation2 + $0x18] sm:$0xff] %v786
    %808 = vst [vmem:[#allocation2 + $0x20] sm:$0xff] %v791
    %809 = vst [vmem:[#allocation2 + $0x28] sm:$0xff] %v796
    %810 = vst [vmem:[#allocation2 + $0x30] sm:$0xff] %v801
    %v811 = vld [vmem:[#allocation4] sm:$0xff]
    %v812 = vld [vmem:[#allocation4 + $0x8] sm:$0xff]
    %v813 = vld [vmem:[#allocation4 + $0x10] sm:$0xff]
    %v814 = vld [vmem:[#allocation4 + $0x18] sm:$0xff]
    %v815 = vld [vmem:[#allocation6] sm:$0xff]
    %v816 = vld [vmem:[#allocation6 + $0x8] sm:$0xff]
    %v817 = vld [vmem:[#allocation6 + $0x10] sm:$0xff]
    %v818 = vld [vmem:[#allocation6 + $0x18] sm:$0xff]
    %v819 = vld [vmem:[#allocation6 + $0x20] sm:$0xff]
    %v820 = vld [vmem:[#allocation6 + $0x28] sm:$0xff]
    %v821 = vld [vmem:[#allocation6 + $0x30] sm:$0xff]
    %v822 = vld [vmem:[#allocation6 + $0x38] sm:$0xff]
    %v823 = vld [vmem:[%s9] sm:$0x1]
    loop: start=0, step=1, limit=7
    $region74: #{rnn_forward.1} parent=1 // loop_pre_header
      _
    $region75: #{rnn_forward.1} parent=1 // loop_header
      %s825 = sphi 0, %s829
      %p826 = scmp.ge.s32.totalorder %s825, 7
      %v830 = vphi 0.0, %v1809
      %v831 = vphi 0.0, %v1803
      %v832 = vphi 0.0, %v1914
      %v833 = vphi 0.0, %v1908
      %v834 = vphi 0.0, %v1997
    $region76: #{rnn_forward.1} parent=1 // loop_header_branch
      %828 = sbr.rel (%p826) target = $region80
    $region77: #{rnn_forward.1} parent=1 // loop_body
      %s835 = smul.u32 %s825, 4
      %s836 = smul.u32 %s825, 8
      %s837 = scalar_lea.vmem [#allocation2], %s836
      %v838 = vld [vmem:[%s837] sm:$0x3]
      %840 = vrot.lane.b32.xlu0 %v830, 32
      %v841 = vpop.permute.xlu0 %840
      %vm842 = vcmask 261120
      %v843 = vsel %vm842, %v841, 0
      %845 = vmatprep.subr.mxu0 0.0
      %846 = vmatpush1.msra.mxu0 0.0
      %847 = vmatprep.subr.mxu0 0.0
      %848 = vmatpush1.msra.mxu0 0.0
      %849 = vmatprep.subr.mxu0 0.0
      %850 = vmatpush1.msra.mxu0 0.0
      %851 = vmatprep.subr.mxu0 0.0
      %852 = vmatpush1.msra.mxu0 0.0
      %853 = vmatprep.subr.mxu0 0.0
      %854 = vmatpush1.msra.mxu0 0.0
      %855 = vmatprep.subr.mxu0 0.0
      %856 = vmatpush1.msra.mxu0 0.0
      %857 = vmatprep.subr.mxu0 0.0
      %858 = vmatpush1.msra.mxu0 0.0
      %859 = vmatprep.subr.mxu0 0.0
      %860 = vmatpush1.msra.mxu0 0.0
      %861 = vmatprep.subr.mxu0 0.0
      %862 = vmatpush1.msra.mxu0 0.0
      %863 = vmatprep.subr.mxu0 0.0
      %864 = vmatpush1.msra.mxu0 0.0
      %865 = vmatprep.subr.mxu0 0.0
      %866 = vmatpush1.msra.mxu0 0.0
      %867 = vmatprep.subr.mxu0 0.0
      %868 = vmatpush1.msra.mxu0 0.0
      %869 = vmatprep.subr.mxu0 0.0
      %870 = vmatpush1.msra.mxu0 %v814
      %871 = vmatprep.subr.mxu0 0.0
      %872 = vmatpush1.msra.mxu0 %v813
      %873 = vmatprep.subr.mxu0 0.0
      %874 = vmatpush1.msra.mxu0 %v812
      %875 = vmatprep.subr.mxu0 0.0
      %876 = vmatpush1.msra.mxu0 %v811
      %877 = vmatprep.subr.mxu0 0.0
      %878 = vmatpush2.msra.mxu0 0.0
      %879 = vmatprep.subr.mxu0 0.0
      %880 = vmatpush2.msra.mxu0 0.0
      %881 = vmatprep.subr.mxu0 0.0
      %882 = vmatpush2.msra.mxu0 0.0
      %883 = vmatprep.subr.mxu0 0.0
      %884 = vmatpush2.msra.mxu0 0.0
      %885 = vmatprep.subr.mxu0 0.0
      %886 = vmatpush2.msra.mxu0 0.0
      %887 = vmatprep.subr.mxu0 0.0
      %888 = vmatpush2.msra.mxu0 0.0
      %889 = vmatprep.subr.mxu0 0.0
      %890 = vmatpush2.msra.mxu0 0.0
      %891 = vmatprep.subr.mxu0 0.0
      %892 = vmatpush2.msra.mxu0 0.0
      %893 = vmatprep.subr.mxu0 0.0
      %894 = vmatpush2.msra.mxu0 0.0
      %895 = vmatprep.subr.mxu0 0.0
      %896 = vmatpush2.msra.mxu0 0.0
      %897 = vmatprep.subr.mxu0 0.0
      %898 = vmatpush2.msra.mxu0 0.0
      %899 = vmatprep.subr.mxu0 0.0
      %900 = vmatpush2.msra.mxu0 0.0
      %901 = vmatprep.subr.mxu0 0.0
      %902 = vmatpush2.msra.mxu0 0.0
      %903 = vmatprep.subr.mxu0 0.0
      %904 = vmatpush2.msra.mxu0 0.0
      %905 = vmatprep.subr.mxu0 0.0
      %906 = vmatpush2.msra.mxu0 0.0
      %907 = vmatprep.subr.mxu0 0.0
      %908 = vmatpush2.msra.mxu0 0.0
      %909 = vmatprep.mubr.f32.mxu0 0.0
      %910 = vmatmul.mubr.f32.gmra.mxu0 %v843
      %v911 = vpop.f32.mrf.mxu0
      %v912 = vadd.f32 0.0, %v911
      %v913 = vpop.f32.mrf.mxu0
      %914 = vdwg.mxu0
      %v915 = vadd.f32 %v838, %v912
      %v916 = vxor.u32 %v915, 2147483648
      %v917 = vmul.f32 %v916, 1.442695
      %v918 = vpow.pop %v917
      %v919 = vadd.f32 %v918, 1.0
      %v920 = vrcp.pop %v919
      %v921 = vmul.f32 1.0, %v920
      %v922 = vtanh.pop %v915
      %v923 = vmul.f32 %v921, %v831
      %925 = vrot.lane.b32.xlu0 %v922, 64
      %v926 = vpop.permute.xlu0 %925
      %v928 = vmul.f32 %v921, %v926
      %930 = vrot.lane.b32.xlu0 %v928, 32
      %v931 = vpop.permute.xlu0 %930
      %v933 = vadd.f32 %v923, %v931
      %v934 = vtanh.pop %v933
      %936 = vrot.lane.b32.xlu0 %v934, 64
      %v937 = vpop.permute.xlu0 %936
      %v939 = vmul.f32 %v921, %v937
      %941 = vrot.lane.b32.xlu0 %v939, 32
      %v942 = vpop.permute.xlu0 %941
      %945 = vrot.lane.b32.xlu0 %v832, 64
      %v946 = vpop.permute.xlu0 %945
      %v948 = vsel %vm842, %v942, %v946
      %v950 = vlaneseq
      %v951 = vshrl.u32 %v950, 7
      %v952 = vsub.s32 0, %v951
      %v953 = vrot.slane %v823, %v952
      %v956 = vsel %vm682, %v948, 0
      %958 = vmatprep.subr.mxu0 0.0
      %959 = vmatpush1.msra.mxu0 0.0
      %960 = vmatprep.subr.mxu0 0.0
      %961 = vmatpush1.msra.mxu0 0.0
      %962 = vmatprep.subr.mxu0 0.0
      %963 = vmatpush1.msra.mxu0 0.0
      %964 = vmatprep.subr.mxu0 0.0
      %965 = vmatpush1.msra.mxu0 0.0
      %966 = vmatprep.subr.mxu0 0.0
      %967 = vmatpush1.msra.mxu0 0.0
      %968 = vmatprep.subr.mxu0 0.0
      %969 = vmatpush1.msra.mxu0 0.0
      %970 = vmatprep.subr.mxu0 0.0
      %971 = vmatpush1.msra.mxu0 0.0
      %972 = vmatprep.subr.mxu0 0.0
      %973 = vmatpush1.msra.mxu0 0.0
      %974 = vmatprep.subr.mxu0 0.0
      %975 = vmatpush1.msra.mxu0 %v822
      %976 = vmatprep.subr.mxu0 0.0
      %977 = vmatpush1.msra.mxu0 %v821
      %978 = vmatprep.subr.mxu0 0.0
      %979 = vmatpush1.msra.mxu0 %v820
      %980 = vmatprep.subr.mxu0 0.0
      %981 = vmatpush1.msra.mxu0 %v819
      %982 = vmatprep.subr.mxu0 0.0
      %983 = vmatpush1.msra.mxu0 %v818
      %984 = vmatprep.subr.mxu0 0.0
      %985 = vmatpush1.msra.mxu0 %v817
      %986 = vmatprep.subr.mxu0 0.0
      %987 = vmatpush1.msra.mxu0 %v816
      %988 = vmatprep.subr.mxu0 0.0
      %989 = vmatpush1.msra.mxu0 %v815
      %990 = vmatprep.subr.mxu0 0.0
      %991 = vmatpush2.msra.mxu0 0.0
      %992 = vmatprep.subr.mxu0 0.0
      %993 = vmatpush2.msra.mxu0 0.0
      %994 = vmatprep.subr.mxu0 0.0
      %995 = vmatpush2.msra.mxu0 0.0
      %996 = vmatprep.subr.mxu0 0.0
      %997 = vmatpush2.msra.mxu0 0.0
      %998 = vmatprep.subr.mxu0 0.0
      %999 = vmatpush2.msra.mxu0 0.0
      %1000 = vmatprep.subr.mxu0 0.0
      %1001 = vmatpush2.msra.mxu0 0.0
      %1002 = vmatprep.subr.mxu0 0.0
      %1003 = vmatpush2.msra.mxu0 0.0
      %1004 = vmatprep.subr.mxu0 0.0
      %1005 = vmatpush2.msra.mxu0 0.0
      %1006 = vmatprep.subr.mxu0 0.0
      %1007 = vmatpush2.msra.mxu0 0.0
      %1008 = vmatprep.subr.mxu0 0.0
      %1009 = vmatpush2.msra.mxu0 0.0
      %1010 = vmatprep.subr.mxu0 0.0
      %1011 = vmatpush2.msra.mxu0 0.0
      %1012 = vmatprep.subr.mxu0 0.0
      %1013 = vmatpush2.msra.mxu0 0.0
      %1014 = vmatprep.subr.mxu0 0.0
      %1015 = vmatpush2.msra.mxu0 0.0
      %1016 = vmatprep.subr.mxu0 0.0
      %1017 = vmatpush2.msra.mxu0 0.0
      %1018 = vmatprep.subr.mxu0 0.0
      %1019 = vmatpush2.msra.mxu0 0.0
      %1020 = vmatprep.subr.mxu0 0.0
      %1021 = vmatpush2.msra.mxu0 0.0
      %1022 = vmatprep.mubr.f32.mxu0 0.0
      %1023 = vmatmul.mubr.f32.gmra.mxu0 %v956
      %v1024 = vpop.f32.mrf.mxu0
      %v1025 = vadd.f32 %v953, %v1024
      %v1026 = vpop.f32.mrf.mxu0
      %1027 = vdwg.mxu0
      %v1028 = vxor.u32 %v1025, 2147483648
      %v1029 = vmul.f32 %v1028, 1.442695
      %v1030 = vpow.pop %v1029
      %v1031 = vadd.f32 %v1030, 1.0
      %v1032 = vrcp.pop %v1031
      %v1033 = vmul.f32 1.0, %v1032
      %v1034 = vtanh.pop %v1025
      %v1035 = vmul.f32 %v1033, %v833
      %1037 = vrot.lane.b32.xlu0 %v1034, 64
      %v1038 = vpop.permute.xlu0 %1037
      %v1040 = vmul.f32 %v1033, %v1038
      %1042 = vrot.lane.b32.xlu0 %v1040, 32
      %v1043 = vpop.permute.xlu0 %1042
      %v1045 = vadd.f32 %v1035, %v1043
      %v1046 = vtanh.pop %v1045
      %1048 = vrot.lane.b32.xlu0 %v1046, 64
      %v1049 = vpop.permute.xlu0 %1048
      %v1051 = vmul.f32 %v1033, %v1049
      %s1052 = smul.u32 %s835, 32
      %s1053 = scalar_lea.vmem %s10, %s1052
      %v1054 = vld [vmem:[%s1053] sm:$0xff]
      %v1055 = vld [vmem:[%s1053 + $0x8] sm:$0xff]
      %v1056 = vld [vmem:[%s1053 + $0x10] sm:$0xff]
      %v1057 = vld [vmem:[%s1053 + $0x18] sm:$0xff]
      %1059 = vrot.lane.b32.xlu0 %v1051, 32
      %v1060 = vpop.permute.xlu0 %1059
      %v1061 = vsel %vm842, %v1060, 0
      %1063 = vmatprep.subr.mxu0 0.0
      %1064 = vmatpush1.msra.mxu0 0.0
      %1065 = vmatprep.subr.mxu0 0.0
      %1066 = vmatpush1.msra.mxu0 0.0
      %1067 = vmatprep.subr.mxu0 0.0
      %1068 = vmatpush1.msra.mxu0 0.0
      %1069 = vmatprep.subr.mxu0 0.0
      %1070 = vmatpush1.msra.mxu0 0.0
      %1071 = vmatprep.subr.mxu0 0.0
      %1072 = vmatpush1.msra.mxu0 0.0
      %1073 = vmatprep.subr.mxu0 0.0
      %1074 = vmatpush1.msra.mxu0 0.0
      %1075 = vmatprep.subr.mxu0 0.0
      %1076 = vmatpush1.msra.mxu0 0.0
      %1077 = vmatprep.subr.mxu0 0.0
      %1078 = vmatpush1.msra.mxu0 0.0
      %1079 = vmatprep.subr.mxu0 0.0
      %1080 = vmatpush1.msra.mxu0 0.0
      %1081 = vmatprep.subr.mxu0 0.0
      %1082 = vmatpush1.msra.mxu0 0.0
      %1083 = vmatprep.subr.mxu0 0.0
      %1084 = vmatpush1.msra.mxu0 0.0
      %1085 = vmatprep.subr.mxu0 0.0
      %1086 = vmatpush1.msra.mxu0 0.0
      %1087 = vmatprep.subr.mxu0 0.0
      %1088 = vmatpush1.msra.mxu0 %v1057
      %1089 = vmatprep.subr.mxu0 0.0
      %1090 = vmatpush1.msra.mxu0 %v1056
      %1091 = vmatprep.subr.mxu0 0.0
      %1092 = vmatpush1.msra.mxu0 %v1055
      %1093 = vmatprep.subr.mxu0 0.0
      %1094 = vmatpush1.msra.mxu0 %v1054
      %1095 = vmatprep.subr.mxu0 0.0
      %1096 = vmatpush2.msra.mxu0 0.0
      %1097 = vmatprep.subr.mxu0 0.0
      %1098 = vmatpush2.msra.mxu0 0.0
      %1099 = vmatprep.subr.mxu0 0.0
      %1100 = vmatpush2.msra.mxu0 0.0
      %1101 = vmatprep.subr.mxu0 0.0
      %1102 = vmatpush2.msra.mxu0 0.0
      %1103 = vmatprep.subr.mxu0 0.0
      %1104 = vmatpush2.msra.mxu0 0.0
      %1105 = vmatprep.subr.mxu0 0.0
      %1106 = vmatpush2.msra.mxu0 0.0
      %1107 = vmatprep.subr.mxu0 0.0
      %1108 = vmatpush2.msra.mxu0 0.0
      %1109 = vmatprep.subr.mxu0 0.0
      %1110 = vmatpush2.msra.mxu0 0.0
      %1111 = vmatprep.subr.mxu0 0.0
      %1112 = vmatpush2.msra.mxu0 0.0
      %1113 = vmatprep.subr.mxu0 0.0
      %1114 = vmatpush2.msra.mxu0 0.0
      %1115 = vmatprep.subr.mxu0 0.0
      %1116 = vmatpush2.msra.mxu0 0.0
      %1117 = vmatprep.subr.mxu0 0.0
      %1118 = vmatpush2.msra.mxu0 0.0
      %1119 = vmatprep.subr.mxu0 0.0
      %1120 = vmatpush2.msra.mxu0 0.0
      %1121 = vmatprep.subr.mxu0 0.0
      %1122 = vmatpush2.msra.mxu0 0.0
      %1123 = vmatprep.subr.mxu0 0.0
      %1124 = vmatpush2.msra.mxu0 0.0
      %1125 = vmatprep.subr.mxu0 0.0
      %1126 = vmatpush2.msra.mxu0 0.0
      %1127 = vmatprep.mubr.f32.mxu0 0.0
      %1128 = vmatmul.mubr.f32.gmra.mxu0 %v1061
      %v1129 = vpop.f32.mrf.mxu0
      %v1130 = vadd.f32 0.0, %v1129
      %v1131 = vpop.f32.mrf.mxu0
      %1132 = vdwg.mxu0
      %v1133 = vadd.f32 %v834, %v1130
      %s1134 = sadd.s32 %s836, 2
      %s1135 = scalar_lea.vmem [#allocation2], %s1134
      %v1136 = vld [vmem:[%s1135] sm:$0x3]
      %v1137 = vsel %vm842, %v942, 0
      %1139 = vmatprep.subr.mxu0 0.0
      %1140 = vmatpush1.msra.mxu0 0.0
      %1141 = vmatprep.subr.mxu0 0.0
      %1142 = vmatpush1.msra.mxu0 0.0
      %1143 = vmatprep.subr.mxu0 0.0
      %1144 = vmatpush1.msra.mxu0 0.0
      %1145 = vmatprep.subr.mxu0 0.0
      %1146 = vmatpush1.msra.mxu0 0.0
      %1147 = vmatprep.subr.mxu0 0.0
      %1148 = vmatpush1.msra.mxu0 0.0
      %1149 = vmatprep.subr.mxu0 0.0
      %1150 = vmatpush1.msra.mxu0 0.0
      %1151 = vmatprep.subr.mxu0 0.0
      %1152 = vmatpush1.msra.mxu0 0.0
      %1153 = vmatprep.subr.mxu0 0.0
      %1154 = vmatpush1.msra.mxu0 0.0
      %1155 = vmatprep.subr.mxu0 0.0
      %1156 = vmatpush1.msra.mxu0 0.0
      %1157 = vmatprep.subr.mxu0 0.0
      %1158 = vmatpush1.msra.mxu0 0.0
      %1159 = vmatprep.subr.mxu0 0.0
      %1160 = vmatpush1.msra.mxu0 0.0
      %1161 = vmatprep.subr.mxu0 0.0
      %1162 = vmatpush1.msra.mxu0 0.0
      %1163 = vmatprep.subr.mxu0 0.0
      %1164 = vmatpush1.msra.mxu0 %v814
      %1165 = vmatprep.subr.mxu0 0.0
      %1166 = vmatpush1.msra.mxu0 %v813
      %1167 = vmatprep.subr.mxu0 0.0
      %1168 = vmatpush1.msra.mxu0 %v812
      %1169 = vmatprep.subr.mxu0 0.0
      %1170 = vmatpush1.msra.mxu0 %v811
      %1171 = vmatprep.subr.mxu0 0.0
      %1172 = vmatpush2.msra.mxu0 0.0
      %1173 = vmatprep.subr.mxu0 0.0
      %1174 = vmatpush2.msra.mxu0 0.0
      %1175 = vmatprep.subr.mxu0 0.0
      %1176 = vmatpush2.msra.mxu0 0.0
      %1177 = vmatprep.subr.mxu0 0.0
      %1178 = vmatpush2.msra.mxu0 0.0
      %1179 = vmatprep.subr.mxu0 0.0
      %1180 = vmatpush2.msra.mxu0 0.0
      %1181 = vmatprep.subr.mxu0 0.0
      %1182 = vmatpush2.msra.mxu0 0.0
      %1183 = vmatprep.subr.mxu0 0.0
      %1184 = vmatpush2.msra.mxu0 0.0
      %1185 = vmatprep.subr.mxu0 0.0
      %1186 = vmatpush2.msra.mxu0 0.0
      %1187 = vmatprep.subr.mxu0 0.0
      %1188 = vmatpush2.msra.mxu0 0.0
      %1189 = vmatprep.subr.mxu0 0.0
      %1190 = vmatpush2.msra.mxu0 0.0
      %1191 = vmatprep.subr.mxu0 0.0
      %1192 = vmatpush2.msra.mxu0 0.0
      %1193 = vmatprep.subr.mxu0 0.0
      %1194 = vmatpush2.msra.mxu0 0.0
      %1195 = vmatprep.subr.mxu0 0.0
      %1196 = vmatpush2.msra.mxu0 0.0
      %1197 = vmatprep.subr.mxu0 0.0
      %1198 = vmatpush2.msra.mxu0 0.0
      %1199 = vmatprep.subr.mxu0 0.0
      %1200 = vmatpush2.msra.mxu0 0.0
      %1201 = vmatprep.subr.mxu0 0.0
      %1202 = vmatpush2.msra.mxu0 0.0
      %1203 = vmatprep.mubr.f32.mxu0 0.0
      %1204 = vmatmul.mubr.f32.gmra.mxu0 %v1137
      %v1205 = vpop.f32.mrf.mxu0
      %v1206 = vadd.f32 0.0, %v1205
      %v1207 = vpop.f32.mrf.mxu0
      %1208 = vdwg.mxu0
      %v1209 = vadd.f32 %v1136, %v1206
      %v1210 = vxor.u32 %v1209, 2147483648
      %v1211 = vmul.f32 %v1210, 1.442695
      %v1212 = vpow.pop %v1211
      %v1213 = vadd.f32 %v1212, 1.0
      %v1214 = vrcp.pop %v1213
      %v1215 = vmul.f32 1.0, %v1214
      %v1216 = vtanh.pop %v1209
      %v1217 = vmul.f32 %v1215, %v933
      %1219 = vrot.lane.b32.xlu0 %v1216, 64
      %v1220 = vpop.permute.xlu0 %1219
      %v1222 = vmul.f32 %v1215, %v1220
      %1224 = vrot.lane.b32.xlu0 %v1222, 32
      %v1225 = vpop.permute.xlu0 %1224
      %v1227 = vadd.f32 %v1217, %v1225
      %v1228 = vtanh.pop %v1227
      %1230 = vrot.lane.b32.xlu0 %v1228, 64
      %v1231 = vpop.permute.xlu0 %1230
      %v1233 = vmul.f32 %v1215, %v1231
      %1235 = vrot.lane.b32.xlu0 %v1233, 32
      %v1236 = vpop.permute.xlu0 %1235
      %1238 = vrot.lane.b32.xlu0 %v1051, 64
      %v1239 = vpop.permute.xlu0 %1238
      %v1241 = vsel %vm842, %v1236, %v1239
      %v1243 = vsel %vm682, %v1241, 0
      %1245 = vmatprep.subr.mxu0 0.0
      %1246 = vmatpush1.msra.mxu0 0.0
      %1247 = vmatprep.subr.mxu0 0.0
      %1248 = vmatpush1.msra.mxu0 0.0
      %1249 = vmatprep.subr.mxu0 0.0
      %1250 = vmatpush1.msra.mxu0 0.0
      %1251 = vmatprep.subr.mxu0 0.0
      %1252 = vmatpush1.msra.mxu0 0.0
      %1253 = vmatprep.subr.mxu0 0.0
      %1254 = vmatpush1.msra.mxu0 0.0
      %1255 = vmatprep.subr.mxu0 0.0
      %1256 = vmatpush1.msra.mxu0 0.0
      %1257 = vmatprep.subr.mxu0 0.0
      %1258 = vmatpush1.msra.mxu0 0.0
      %1259 = vmatprep.subr.mxu0 0.0
      %1260 = vmatpush1.msra.mxu0 0.0
      %1261 = vmatprep.subr.mxu0 0.0
      %1262 = vmatpush1.msra.mxu0 %v822
      %1263 = vmatprep.subr.mxu0 0.0
      %1264 = vmatpush1.msra.mxu0 %v821
      %1265 = vmatprep.subr.mxu0 0.0
      %1266 = vmatpush1.msra.mxu0 %v820
      %1267 = vmatprep.subr.mxu0 0.0
      %1268 = vmatpush1.msra.mxu0 %v819
      %1269 = vmatprep.subr.mxu0 0.0
      %1270 = vmatpush1.msra.mxu0 %v818
      %1271 = vmatprep.subr.mxu0 0.0
      %1272 = vmatpush1.msra.mxu0 %v817
      %1273 = vmatprep.subr.mxu0 0.0
      %1274 = vmatpush1.msra.mxu0 %v816
      %1275 = vmatprep.subr.mxu0 0.0
      %1276 = vmatpush1.msra.mxu0 %v815
      %1277 = vmatprep.subr.mxu0 0.0
      %1278 = vmatpush2.msra.mxu0 0.0
      %1279 = vmatprep.subr.mxu0 0.0
      %1280 = vmatpush2.msra.mxu0 0.0
      %1281 = vmatprep.subr.mxu0 0.0
      %1282 = vmatpush2.msra.mxu0 0.0
      %1283 = vmatprep.subr.mxu0 0.0
      %1284 = vmatpush2.msra.mxu0 0.0
      %1285 = vmatprep.subr.mxu0 0.0
      %1286 = vmatpush2.msra.mxu0 0.0
      %1287 = vmatprep.subr.mxu0 0.0
      %1288 = vmatpush2.msra.mxu0 0.0
      %1289 = vmatprep.subr.mxu0 0.0
      %1290 = vmatpush2.msra.mxu0 0.0
      %1291 = vmatprep.subr.mxu0 0.0
      %1292 = vmatpush2.msra.mxu0 0.0
      %1293 = vmatprep.subr.mxu0 0.0
      %1294 = vmatpush2.msra.mxu0 0.0
      %1295 = vmatprep.subr.mxu0 0.0
      %1296 = vmatpush2.msra.mxu0 0.0
      %1297 = vmatprep.subr.mxu0 0.0
      %1298 = vmatpush2.msra.mxu0 0.0
      %1299 = vmatprep.subr.mxu0 0.0
      %1300 = vmatpush2.msra.mxu0 0.0
      %1301 = vmatprep.subr.mxu0 0.0
      %1302 = vmatpush2.msra.mxu0 0.0
      %1303 = vmatprep.subr.mxu0 0.0
      %1304 = vmatpush2.msra.mxu0 0.0
      %1305 = vmatprep.subr.mxu0 0.0
      %1306 = vmatpush2.msra.mxu0 0.0
      %1307 = vmatprep.subr.mxu0 0.0
      %1308 = vmatpush2.msra.mxu0 0.0
      %1309 = vmatprep.mubr.f32.mxu0 0.0
      %1310 = vmatmul.mubr.f32.gmra.mxu0 %v1243
      %v1311 = vpop.f32.mrf.mxu0
      %v1312 = vadd.f32 %v953, %v1311
      %v1313 = vpop.f32.mrf.mxu0
      %1314 = vdwg.mxu0
      %v1315 = vxor.u32 %v1312, 2147483648
      %v1316 = vmul.f32 %v1315, 1.442695
      %v1317 = vpow.pop %v1316
      %v1318 = vadd.f32 %v1317, 1.0
      %v1319 = vrcp.pop %v1318
      %v1320 = vmul.f32 1.0, %v1319
      %v1321 = vtanh.pop %v1312
      %v1322 = vmul.f32 %v1320, %v1045
      %1324 = vrot.lane.b32.xlu0 %v1321, 64
      %v1325 = vpop.permute.xlu0 %1324
      %v1327 = vmul.f32 %v1320, %v1325
      %1329 = vrot.lane.b32.xlu0 %v1327, 32
      %v1330 = vpop.permute.xlu0 %1329
      %v1332 = vadd.f32 %v1322, %v1330
      %v1333 = vtanh.pop %v1332
      %1335 = vrot.lane.b32.xlu0 %v1333, 64
      %v1336 = vpop.permute.xlu0 %1335
      %v1338 = vmul.f32 %v1320, %v1336
      %s1339 = sadd.s32 %s835, 1
      %s1340 = smul.u32 %s1339, 32
      %s1341 = scalar_lea.vmem %s10, %s1340
      %v1342 = vld [vmem:[%s1341] sm:$0xff]
      %v1343 = vld [vmem:[%s1341 + $0x8] sm:$0xff]
      %v1344 = vld [vmem:[%s1341 + $0x10] sm:$0xff]
      %v1345 = vld [vmem:[%s1341 + $0x18] sm:$0xff]
      %1347 = vrot.lane.b32.xlu0 %v1338, 32
      %v1348 = vpop.permute.xlu0 %1347
      %v1349 = vsel %vm842, %v1348, 0
      %1351 = vmatprep.subr.mxu0 0.0
      %1352 = vmatpush1.msra.mxu0 0.0
      %1353 = vmatprep.subr.mxu0 0.0
      %1354 = vmatpush1.msra.mxu0 0.0
      %1355 = vmatprep.subr.mxu0 0.0
      %1356 = vmatpush1.msra.mxu0 0.0
      %1357 = vmatprep.subr.mxu0 0.0
      %1358 = vmatpush1.msra.mxu0 0.0
      %1359 = vmatprep.subr.mxu0 0.0
      %1360 = vmatpush1.msra.mxu0 0.0
      %1361 = vmatprep.subr.mxu0 0.0
      %1362 = vmatpush1.msra.mxu0 0.0
      %1363 = vmatprep.subr.mxu0 0.0
      %1364 = vmatpush1.msra.mxu0 0.0
      %1365 = vmatprep.subr.mxu0 0.0
      %1366 = vmatpush1.msra.mxu0 0.0
      %1367 = vmatprep.subr.mxu0 0.0
      %1368 = vmatpush1.msra.mxu0 0.0
      %1369 = vmatprep.subr.mxu0 0.0
      %1370 = vmatpush1.msra.mxu0 0.0
      %1371 = vmatprep.subr.mxu0 0.0
      %1372 = vmatpush1.msra.mxu0 0.0
      %1373 = vmatprep.subr.mxu0 0.0
      %1374 = vmatpush1.msra.mxu0 0.0
      %1375 = vmatprep.subr.mxu0 0.0
      %1376 = vmatpush1.msra.mxu0 %v1345
      %1377 = vmatprep.subr.mxu0 0.0
      %1378 = vmatpush1.msra.mxu0 %v1344
      %1379 = vmatprep.subr.mxu0 0.0
      %1380 = vmatpush1.msra.mxu0 %v1343
      %1381 = vmatprep.subr.mxu0 0.0
      %1382 = vmatpush1.msra.mxu0 %v1342
      %1383 = vmatprep.subr.mxu0 0.0
      %1384 = vmatpush2.msra.mxu0 0.0
      %1385 = vmatprep.subr.mxu0 0.0
      %1386 = vmatpush2.msra.mxu0 0.0
      %1387 = vmatprep.subr.mxu0 0.0
      %1388 = vmatpush2.msra.mxu0 0.0
      %1389 = vmatprep.subr.mxu0 0.0
      %1390 = vmatpush2.msra.mxu0 0.0
      %1391 = vmatprep.subr.mxu0 0.0
      %1392 = vmatpush2.msra.mxu0 0.0
      %1393 = vmatprep.subr.mxu0 0.0
      %1394 = vmatpush2.msra.mxu0 0.0
      %1395 = vmatprep.subr.mxu0 0.0
      %1396 = vmatpush2.msra.mxu0 0.0
      %1397 = vmatprep.subr.mxu0 0.0
      %1398 = vmatpush2.msra.mxu0 0.0
      %1399 = vmatprep.subr.mxu0 0.0
      %1400 = vmatpush2.msra.mxu0 0.0
      %1401 = vmatprep.subr.mxu0 0.0
      %1402 = vmatpush2.msra.mxu0 0.0
      %1403 = vmatprep.subr.mxu0 0.0
      %1404 = vmatpush2.msra.mxu0 0.0
      %1405 = vmatprep.subr.mxu0 0.0
      %1406 = vmatpush2.msra.mxu0 0.0
      %1407 = vmatprep.subr.mxu0 0.0
      %1408 = vmatpush2.msra.mxu0 0.0
      %1409 = vmatprep.subr.mxu0 0.0
      %1410 = vmatpush2.msra.mxu0 0.0
      %1411 = vmatprep.subr.mxu0 0.0
      %1412 = vmatpush2.msra.mxu0 0.0
      %1413 = vmatprep.subr.mxu0 0.0
      %1414 = vmatpush2.msra.mxu0 0.0
      %1415 = vmatprep.mubr.f32.mxu0 0.0
      %1416 = vmatmul.mubr.f32.gmra.mxu0 %v1349
      %v1417 = vpop.f32.mrf.mxu0
      %v1418 = vadd.f32 0.0, %v1417
      %v1419 = vpop.f32.mrf.mxu0
      %1420 = vdwg.mxu0
      %v1421 = vadd.f32 %v1133, %v1418
      %s1422 = sadd.s32 %s836, 4
      %s1423 = scalar_lea.vmem [#allocation2], %s1422
      %v1424 = vld [vmem:[%s1423] sm:$0x3]
      %v1425 = vsel %vm842, %v1236, 0
      %1427 = vmatprep.subr.mxu0 0.0
      %1428 = vmatpush1.msra.mxu0 0.0
      %1429 = vmatprep.subr.mxu0 0.0
      %1430 = vmatpush1.msra.mxu0 0.0
      %1431 = vmatprep.subr.mxu0 0.0
      %1432 = vmatpush1.msra.mxu0 0.0
      %1433 = vmatprep.subr.mxu0 0.0
      %1434 = vmatpush1.msra.mxu0 0.0
      %1435 = vmatprep.subr.mxu0 0.0
      %1436 = vmatpush1.msra.mxu0 0.0
      %1437 = vmatprep.subr.mxu0 0.0
      %1438 = vmatpush1.msra.mxu0 0.0
      %1439 = vmatprep.subr.mxu0 0.0
      %1440 = vmatpush1.msra.mxu0 0.0
      %1441 = vmatprep.subr.mxu0 0.0
      %1442 = vmatpush1.msra.mxu0 0.0
      %1443 = vmatprep.subr.mxu0 0.0
      %1444 = vmatpush1.msra.mxu0 0.0
      %1445 = vmatprep.subr.mxu0 0.0
      %1446 = vmatpush1.msra.mxu0 0.0
      %1447 = vmatprep.subr.mxu0 0.0
      %1448 = vmatpush1.msra.mxu0 0.0
      %1449 = vmatprep.subr.mxu0 0.0
      %1450 = vmatpush1.msra.mxu0 0.0
      %1451 = vmatprep.subr.mxu0 0.0
      %1452 = vmatpush1.msra.mxu0 %v814
      %1453 = vmatprep.subr.mxu0 0.0
      %1454 = vmatpush1.msra.mxu0 %v813
      %1455 = vmatprep.subr.mxu0 0.0
      %1456 = vmatpush1.msra.mxu0 %v812
      %1457 = vmatprep.subr.mxu0 0.0
      %1458 = vmatpush1.msra.mxu0 %v811
      %1459 = vmatprep.subr.mxu0 0.0
      %1460 = vmatpush2.msra.mxu0 0.0
      %1461 = vmatprep.subr.mxu0 0.0
      %1462 = vmatpush2.msra.mxu0 0.0
      %1463 = vmatprep.subr.mxu0 0.0
      %1464 = vmatpush2.msra.mxu0 0.0
      %1465 = vmatprep.subr.mxu0 0.0
      %1466 = vmatpush2.msra.mxu0 0.0
      %1467 = vmatprep.subr.mxu0 0.0
      %1468 = vmatpush2.msra.mxu0 0.0
      %1469 = vmatprep.subr.mxu0 0.0
      %1470 = vmatpush2.msra.mxu0 0.0
      %1471 = vmatprep.subr.mxu0 0.0
      %1472 = vmatpush2.msra.mxu0 0.0
      %1473 = vmatprep.subr.mxu0 0.0
      %1474 = vmatpush2.msra.mxu0 0.0
      %1475 = vmatprep.subr.mxu0 0.0
      %1476 = vmatpush2.msra.mxu0 0.0
      %1477 = vmatprep.subr.mxu0 0.0
      %1478 = vmatpush2.msra.mxu0 0.0
      %1479 = vmatprep.subr.mxu0 0.0
      %1480 = vmatpush2.msra.mxu0 0.0
      %1481 = vmatprep.subr.mxu0 0.0
      %1482 = vmatpush2.msra.mxu0 0.0
      %1483 = vmatprep.subr.mxu0 0.0
      %1484 = vmatpush2.msra.mxu0 0.0
      %1485 = vmatprep.subr.mxu0 0.0
      %1486 = vmatpush2.msra.mxu0 0.0
      %1487 = vmatprep.subr.mxu0 0.0
      %1488 = vmatpush2.msra.mxu0 0.0
      %1489 = vmatprep.subr.mxu0 0.0
      %1490 = vmatpush2.msra.mxu0 0.0
      %1491 = vmatprep.mubr.f32.mxu0 0.0
      %1492 = vmatmul.mubr.f32.gmra.mxu0 %v1425
      %v1493 = vpop.f32.mrf.mxu0
      %v1494 = vadd.f32 0.0, %v1493
      %v1495 = vpop.f32.mrf.mxu0
      %1496 = vdwg.mxu0
      %v1497 = vadd.f32 %v1424, %v1494
      %v1498 = vxor.u32 %v1497, 2147483648
      %v1499 = vmul.f32 %v1498, 1.442695
      %v1500 = vpow.pop %v1499
      %v1501 = vadd.f32 %v1500, 1.0
      %v1502 = vrcp.pop %v1501
      %v1503 = vmul.f32 1.0, %v1502
      %v1504 = vtanh.pop %v1497
      %v1505 = vmul.f32 %v1503, %v1227
      %1507 = vrot.lane.b32.xlu0 %v1504, 64
      %v1508 = vpop.permute.xlu0 %1507
      %v1510 = vmul.f32 %v1503, %v1508
      %1512 = vrot.lane.b32.xlu0 %v1510, 32
      %v1513 = vpop.permute.xlu0 %1512
      %v1515 = vadd.f32 %v1505, %v1513
      %v1516 = vtanh.pop %v1515
      %1518 = vrot.lane.b32.xlu0 %v1516, 64
      %v1519 = vpop.permute.xlu0 %1518
      %v1521 = vmul.f32 %v1503, %v1519
      %1523 = vrot.lane.b32.xlu0 %v1521, 32
      %v1524 = vpop.permute.xlu0 %1523
      %1526 = vrot.lane.b32.xlu0 %v1338, 64
      %v1527 = vpop.permute.xlu0 %1526
      %v1529 = vsel %vm842, %v1524, %v1527
      %v1531 = vsel %vm682, %v1529, 0
      %1533 = vmatprep.subr.mxu0 0.0
      %1534 = vmatpush1.msra.mxu0 0.0
      %1535 = vmatprep.subr.mxu0 0.0
      %1536 = vmatpush1.msra.mxu0 0.0
      %1537 = vmatprep.subr.mxu0 0.0
      %1538 = vmatpush1.msra.mxu0 0.0
      %1539 = vmatprep.subr.mxu0 0.0
      %1540 = vmatpush1.msra.mxu0 0.0
      %1541 = vmatprep.subr.mxu0 0.0
      %1542 = vmatpush1.msra.mxu0 0.0
      %1543 = vmatprep.subr.mxu0 0.0
      %1544 = vmatpush1.msra.mxu0 0.0
      %1545 = vmatprep.subr.mxu0 0.0
      %1546 = vmatpush1.msra.mxu0 0.0
      %1547 = vmatprep.subr.mxu0 0.0
      %1548 = vmatpush1.msra.mxu0 0.0
      %1549 = vmatprep.subr.mxu0 0.0
      %1550 = vmatpush1.msra.mxu0 %v822
      %1551 = vmatprep.subr.mxu0 0.0
      %1552 = vmatpush1.msra.mxu0 %v821
      %1553 = vmatprep.subr.mxu0 0.0
      %1554 = vmatpush1.msra.mxu0 %v820
      %1555 = vmatprep.subr.mxu0 0.0
      %1556 = vmatpush1.msra.mxu0 %v819
      %1557 = vmatprep.subr.mxu0 0.0
      %1558 = vmatpush1.msra.mxu0 %v818
      %1559 = vmatprep.subr.mxu0 0.0
      %1560 = vmatpush1.msra.mxu0 %v817
      %1561 = vmatprep.subr.mxu0 0.0
      %1562 = vmatpush1.msra.mxu0 %v816
      %1563 = vmatprep.subr.mxu0 0.0
      %1564 = vmatpush1.msra.mxu0 %v815
      %1565 = vmatprep.subr.mxu0 0.0
      %1566 = vmatpush2.msra.mxu0 0.0
      %1567 = vmatprep.subr.mxu0 0.0
      %1568 = vmatpush2.msra.mxu0 0.0
      %1569 = vmatprep.subr.mxu0 0.0
      %1570 = vmatpush2.msra.mxu0 0.0
      %1571 = vmatprep.subr.mxu0 0.0
      %1572 = vmatpush2.msra.mxu0 0.0
      %1573 = vmatprep.subr.mxu0 0.0
      %1574 = vmatpush2.msra.mxu0 0.0
      %1575 = vmatprep.subr.mxu0 0.0
      %1576 = vmatpush2.msra.mxu0 0.0
      %1577 = vmatprep.subr.mxu0 0.0
      %1578 = vmatpush2.msra.mxu0 0.0
      %1579 = vmatprep.subr.mxu0 0.0
      %1580 = vmatpush2.msra.mxu0 0.0
      %1581 = vmatprep.subr.mxu0 0.0
      %1582 = vmatpush2.msra.mxu0 0.0
      %1583 = vmatprep.subr.mxu0 0.0
      %1584 = vmatpush2.msra.mxu0 0.0
      %1585 = vmatprep.subr.mxu0 0.0
      %1586 = vmatpush2.msra.mxu0 0.0
      %1587 = vmatprep.subr.mxu0 0.0
      %1588 = vmatpush2.msra.mxu0 0.0
      %1589 = vmatprep.subr.mxu0 0.0
      %1590 = vmatpush2.msra.mxu0 0.0
      %1591 = vmatprep.subr.mxu0 0.0
      %1592 = vmatpush2.msra.mxu0 0.0
      %1593 = vmatprep.subr.mxu0 0.0
      %1594 = vmatpush2.msra.mxu0 0.0
      %1595 = vmatprep.subr.mxu0 0.0
      %1596 = vmatpush2.msra.mxu0 0.0
      %1597 = vmatprep.mubr.f32.mxu0 0.0
      %1598 = vmatmul.mubr.f32.gmra.mxu0 %v1531
      %v1599 = vpop.f32.mrf.mxu0
      %v1600 = vadd.f32 %v953, %v1599
      %v1601 = vpop.f32.mrf.mxu0
      %1602 = vdwg.mxu0
      %v1603 = vxor.u32 %v1600, 2147483648
      %v1604 = vmul.f32 %v1603, 1.442695
      %v1605 = vpow.pop %v1604
      %v1606 = vadd.f32 %v1605, 1.0
      %v1607 = vrcp.pop %v1606
      %v1608 = vmul.f32 1.0, %v1607
      %v1609 = vtanh.pop %v1600
      %v1610 = vmul.f32 %v1608, %v1332
      %1612 = vrot.lane.b32.xlu0 %v1609, 64
      %v1613 = vpop.permute.xlu0 %1612
      %v1615 = vmul.f32 %v1608, %v1613
      %1617 = vrot.lane.b32.xlu0 %v1615, 32
      %v1618 = vpop.permute.xlu0 %1617
      %v1620 = vadd.f32 %v1610, %v1618
      %v1621 = vtanh.pop %v1620
      %1623 = vrot.lane.b32.xlu0 %v1621, 64
      %v1624 = vpop.permute.xlu0 %1623
      %v1626 = vmul.f32 %v1608, %v1624
      %s1627 = sadd.s32 %s835, 2
      %s1628 = smul.u32 %s1627, 32
      %s1629 = scalar_lea.vmem %s10, %s1628
      %v1630 = vld [vmem:[%s1629] sm:$0xff]
      %v1631 = vld [vmem:[%s1629 + $0x8] sm:$0xff]
      %v1632 = vld [vmem:[%s1629 + $0x10] sm:$0xff]
      %v1633 = vld [vmem:[%s1629 + $0x18] sm:$0xff]
      %1635 = vrot.lane.b32.xlu0 %v1626, 32
      %v1636 = vpop.permute.xlu0 %1635
      %v1637 = vsel %vm842, %v1636, 0
      %1639 = vmatprep.subr.mxu0 0.0
      %1640 = vmatpush1.msra.mxu0 0.0
      %1641 = vmatprep.subr.mxu0 0.0
      %1642 = vmatpush1.msra.mxu0 0.0
      %1643 = vmatprep.subr.mxu0 0.0
      %1644 = vmatpush1.msra.mxu0 0.0
      %1645 = vmatprep.subr.mxu0 0.0
      %1646 = vmatpush1.msra.mxu0 0.0
      %1647 = vmatprep.subr.mxu0 0.0
      %1648 = vmatpush1.msra.mxu0 0.0
      %1649 = vmatprep.subr.mxu0 0.0
      %1650 = vmatpush1.msra.mxu0 0.0
      %1651 = vmatprep.subr.mxu0 0.0
      %1652 = vmatpush1.msra.mxu0 0.0
      %1653 = vmatprep.subr.mxu0 0.0
      %1654 = vmatpush1.msra.mxu0 0.0
      %1655 = vmatprep.subr.mxu0 0.0
      %1656 = vmatpush1.msra.mxu0 0.0
      %1657 = vmatprep.subr.mxu0 0.0
      %1658 = vmatpush1.msra.mxu0 0.0
      %1659 = vmatprep.subr.mxu0 0.0
      %1660 = vmatpush1.msra.mxu0 0.0
      %1661 = vmatprep.subr.mxu0 0.0
      %1662 = vmatpush1.msra.mxu0 0.0
      %1663 = vmatprep.subr.mxu0 0.0
      %1664 = vmatpush1.msra.mxu0 %v1633
      %1665 = vmatprep.subr.mxu0 0.0
      %1666 = vmatpush1.msra.mxu0 %v1632
      %1667 = vmatprep.subr.mxu0 0.0
      %1668 = vmatpush1.msra.mxu0 %v1631
      %1669 = vmatprep.subr.mxu0 0.0
      %1670 = vmatpush1.msra.mxu0 %v1630
      %1671 = vmatprep.subr.mxu0 0.0
      %1672 = vmatpush2.msra.mxu0 0.0
      %1673 = vmatprep.subr.mxu0 0.0
      %1674 = vmatpush2.msra.mxu0 0.0
      %1675 = vmatprep.subr.mxu0 0.0
      %1676 = vmatpush2.msra.mxu0 0.0
      %1677 = vmatprep.subr.mxu0 0.0
      %1678 = vmatpush2.msra.mxu0 0.0
      %1679 = vmatprep.subr.mxu0 0.0
      %1680 = vmatpush2.msra.mxu0 0.0
      %1681 = vmatprep.subr.mxu0 0.0
      %1682 = vmatpush2.msra.mxu0 0.0
      %1683 = vmatprep.subr.mxu0 0.0
      %1684 = vmatpush2.msra.mxu0 0.0
      %1685 = vmatprep.subr.mxu0 0.0
      %1686 = vmatpush2.msra.mxu0 0.0
      %1687 = vmatprep.subr.mxu0 0.0
      %1688 = vmatpush2.msra.mxu0 0.0
      %1689 = vmatprep.subr.mxu0 0.0
      %1690 = vmatpush2.msra.mxu0 0.0
      %1691 = vmatprep.subr.mxu0 0.0
      %1692 = vmatpush2.msra.mxu0 0.0
      %1693 = vmatprep.subr.mxu0 0.0
      %1694 = vmatpush2.msra.mxu0 0.0
      %1695 = vmatprep.subr.mxu0 0.0
      %1696 = vmatpush2.msra.mxu0 0.0
      %1697 = vmatprep.subr.mxu0 0.0
      %1698 = vmatpush2.msra.mxu0 0.0
      %1699 = vmatprep.subr.mxu0 0.0
      %1700 = vmatpush2.msra.mxu0 0.0
      %1701 = vmatprep.subr.mxu0 0.0
      %1702 = vmatpush2.msra.mxu0 0.0
      %1703 = vmatprep.mubr.f32.mxu0 0.0
      %1704 = vmatmul.mubr.f32.gmra.mxu0 %v1637
      %v1705 = vpop.f32.mrf.mxu0
      %v1706 = vadd.f32 0.0, %v1705
      %v1707 = vpop.f32.mrf.mxu0
      %1708 = vdwg.mxu0
      %v1709 = vadd.f32 %v1421, %v1706
      %s1710 = sadd.s32 %s836, 6
      %s1711 = scalar_lea.vmem [#allocation2], %s1710
      %v1712 = vld [vmem:[%s1711] sm:$0x3]
      %v1713 = vsel %vm842, %v1524, 0
      %1715 = vmatprep.subr.mxu0 0.0
      %1716 = vmatpush1.msra.mxu0 0.0
      %1717 = vmatprep.subr.mxu0 0.0
      %1718 = vmatpush1.msra.mxu0 0.0
      %1719 = vmatprep.subr.mxu0 0.0
      %1720 = vmatpush1.msra.mxu0 0.0
      %1721 = vmatprep.subr.mxu0 0.0
      %1722 = vmatpush1.msra.mxu0 0.0
      %1723 = vmatprep.subr.mxu0 0.0
      %1724 = vmatpush1.msra.mxu0 0.0
      %1725 = vmatprep.subr.mxu0 0.0
      %1726 = vmatpush1.msra.mxu0 0.0
      %1727 = vmatprep.subr.mxu0 0.0
      %1728 = vmatpush1.msra.mxu0 0.0
      %1729 = vmatprep.subr.mxu0 0.0
      %1730 = vmatpush1.msra.mxu0 0.0
      %1731 = vmatprep.subr.mxu0 0.0
      %1732 = vmatpush1.msra.mxu0 0.0
      %1733 = vmatprep.subr.mxu0 0.0
      %1734 = vmatpush1.msra.mxu0 0.0
      %1735 = vmatprep.subr.mxu0 0.0
      %1736 = vmatpush1.msra.mxu0 0.0
      %1737 = vmatprep.subr.mxu0 0.0
      %1738 = vmatpush1.msra.mxu0 0.0
      %1739 = vmatprep.subr.mxu0 0.0
      %1740 = vmatpush1.msra.mxu0 %v814
      %1741 = vmatprep.subr.mxu0 0.0
      %1742 = vmatpush1.msra.mxu0 %v813
      %1743 = vmatprep.subr.mxu0 0.0
      %1744 = vmatpush1.msra.mxu0 %v812
      %1745 = vmatprep.subr.mxu0 0.0
      %1746 = vmatpush1.msra.mxu0 %v811
      %1747 = vmatprep.subr.mxu0 0.0
      %1748 = vmatpush2.msra.mxu0 0.0
      %1749 = vmatprep.subr.mxu0 0.0
      %1750 = vmatpush2.msra.mxu0 0.0
      %1751 = vmatprep.subr.mxu0 0.0
      %1752 = vmatpush2.msra.mxu0 0.0
      %1753 = vmatprep.subr.mxu0 0.0
      %1754 = vmatpush2.msra.mxu0 0.0
      %1755 = vmatprep.subr.mxu0 0.0
      %1756 = vmatpush2.msra.mxu0 0.0
      %1757 = vmatprep.subr.mxu0 0.0
      %1758 = vmatpush2.msra.mxu0 0.0
      %1759 = vmatprep.subr.mxu0 0.0
      %1760 = vmatpush2.msra.mxu0 0.0
      %1761 = vmatprep.subr.mxu0 0.0
      %1762 = vmatpush2.msra.mxu0 0.0
      %1763 = vmatprep.subr.mxu0 0.0
      %1764 = vmatpush2.msra.mxu0 0.0
      %1765 = vmatprep.subr.mxu0 0.0
      %1766 = vmatpush2.msra.mxu0 0.0
      %1767 = vmatprep.subr.mxu0 0.0
      %1768 = vmatpush2.msra.mxu0 0.0
      %1769 = vmatprep.subr.mxu0 0.0
      %1770 = vmatpush2.msra.mxu0 0.0
      %1771 = vmatprep.subr.mxu0 0.0
      %1772 = vmatpush2.msra.mxu0 0.0
      %1773 = vmatprep.subr.mxu0 0.0
      %1774 = vmatpush2.msra.mxu0 0.0
      %1775 = vmatprep.subr.mxu0 0.0
      %1776 = vmatpush2.msra.mxu0 0.0
      %1777 = vmatprep.subr.mxu0 0.0
      %1778 = vmatpush2.msra.mxu0 0.0
      %1779 = vmatprep.mubr.f32.mxu0 0.0
      %1780 = vmatmul.mubr.f32.gmra.mxu0 %v1713
      %v1781 = vpop.f32.mrf.mxu0
      %v1782 = vadd.f32 0.0, %v1781
      %v1783 = vpop.f32.mrf.mxu0
      %1784 = vdwg.mxu0
      %v1785 = vadd.f32 %v1712, %v1782
      %v1786 = vxor.u32 %v1785, 2147483648
      %v1787 = vmul.f32 %v1786, 1.442695
      %v1788 = vpow.pop %v1787
      %v1789 = vadd.f32 %v1788, 1.0
      %v1790 = vrcp.pop %v1789
      %v1791 = vmul.f32 1.0, %v1790
      %v1792 = vtanh.pop %v1785
      %v1793 = vmul.f32 %v1791, %v1515
      %1795 = vrot.lane.b32.xlu0 %v1792, 64
      %v1796 = vpop.permute.xlu0 %1795
      %v1798 = vmul.f32 %v1791, %v1796
      %1800 = vrot.lane.b32.xlu0 %v1798, 32
      %v1801 = vpop.permute.xlu0 %1800
      %v1803 = vadd.f32 %v1793, %v1801
      %v1804 = vtanh.pop %v1803
      %1806 = vrot.lane.b32.xlu0 %v1804, 64
      %v1807 = vpop.permute.xlu0 %1806
      %v1809 = vmul.f32 %v1791, %v1807
      %1811 = vrot.lane.b32.xlu0 %v1809, 32
      %v1812 = vpop.permute.xlu0 %1811
      %1814 = vrot.lane.b32.xlu0 %v1626, 64
      %v1815 = vpop.permute.xlu0 %1814
      %v1817 = vsel %vm842, %v1812, %v1815
      %v1819 = vsel %vm682, %v1817, 0
      %1821 = vmatprep.subr.mxu0 0.0
      %1822 = vmatpush1.msra.mxu0 0.0
      %1823 = vmatprep.subr.mxu0 0.0
      %1824 = vmatpush1.msra.mxu0 0.0
      %1825 = vmatprep.subr.mxu0 0.0
      %1826 = vmatpush1.msra.mxu0 0.0
      %1827 = vmatprep.subr.mxu0 0.0
      %1828 = vmatpush1.msra.mxu0 0.0
      %1829 = vmatprep.subr.mxu0 0.0
      %1830 = vmatpush1.msra.mxu0 0.0
      %1831 = vmatprep.subr.mxu0 0.0
      %1832 = vmatpush1.msra.mxu0 0.0
      %1833 = vmatprep.subr.mxu0 0.0
      %1834 = vmatpush1.msra.mxu0 0.0
      %1835 = vmatprep.subr.mxu0 0.0
      %1836 = vmatpush1.msra.mxu0 0.0
      %1837 = vmatprep.subr.mxu0 0.0
      %1838 = vmatpush1.msra.mxu0 %v822
      %1839 = vmatprep.subr.mxu0 0.0
      %1840 = vmatpush1.msra.mxu0 %v821
      %1841 = vmatprep.subr.mxu0 0.0
      %1842 = vmatpush1.msra.mxu0 %v820
      %1843 = vmatprep.subr.mxu0 0.0
      %1844 = vmatpush1.msra.mxu0 %v819
      %1845 = vmatprep.subr.mxu0 0.0
      %1846 = vmatpush1.msra.mxu0 %v818
      %1847 = vmatprep.subr.mxu0 0.0
      %1848 = vmatpush1.msra.mxu0 %v817
      %1849 = vmatprep.subr.mxu0 0.0
      %1850 = vmatpush1.msra.mxu0 %v816
      %1851 = vmatprep.subr.mxu0 0.0
      %1852 = vmatpush1.msra.mxu0 %v815
      %1853 = vmatprep.subr.mxu0 0.0
      %1854 = vmatpush2.msra.mxu0 0.0
      %1855 = vmatprep.subr.mxu0 0.0
      %1856 = vmatpush2.msra.mxu0 0.0
      %1857 = vmatprep.subr.mxu0 0.0
      %1858 = vmatpush2.msra.mxu0 0.0
      %1859 = vmatprep.subr.mxu0 0.0
      %1860 = vmatpush2.msra.mxu0 0.0
      %1861 = vmatprep.subr.mxu0 0.0
      %1862 = vmatpush2.msra.mxu0 0.0
      %1863 = vmatprep.subr.mxu0 0.0
      %1864 = vmatpush2.msra.mxu0 0.0
      %1865 = vmatprep.subr.mxu0 0.0
      %1866 = vmatpush2.msra.mxu0 0.0
      %1867 = vmatprep.subr.mxu0 0.0
      %1868 = vmatpush2.msra.mxu0 0.0
      %1869 = vmatprep.subr.mxu0 0.0
      %1870 = vmatpush2.msra.mxu0 0.0
      %1871 = vmatprep.subr.mxu0 0.0
      %1872 = vmatpush2.msra.mxu0 0.0
      %1873 = vmatprep.subr.mxu0 0.0
      %1874 = vmatpush2.msra.mxu0 0.0
      %1875 = vmatprep.subr.mxu0 0.0
      %1876 = vmatpush2.msra.mxu0 0.0
      %1877 = vmatprep.subr.mxu0 0.0
      %1878 = vmatpush2.msra.mxu0 0.0
      %1879 = vmatprep.subr.mxu0 0.0
      %1880 = vmatpush2.msra.mxu0 0.0
      %1881 = vmatprep.subr.mxu0 0.0
      %1882 = vmatpush2.msra.mxu0 0.0
      %1883 = vmatprep.subr.mxu0 0.0
      %1884 = vmatpush2.msra.mxu0 0.0
      %1885 = vmatprep.mubr.f32.mxu0 0.0
      %1886 = vmatmul.mubr.f32.gmra.mxu0 %v1819
      %v1887 = vpop.f32.mrf.mxu0
      %v1888 = vadd.f32 %v953, %v1887
      %v1889 = vpop.f32.mrf.mxu0
      %1890 = vdwg.mxu0
      %v1891 = vxor.u32 %v1888, 2147483648
      %v1892 = vmul.f32 %v1891, 1.442695
      %v1893 = vpow.pop %v1892
      %v1894 = vadd.f32 %v1893, 1.0
      %v1895 = vrcp.pop %v1894
      %v1896 = vmul.f32 1.0, %v1895
      %v1897 = vtanh.pop %v1888
      %v1898 = vmul.f32 %v1896, %v1620
      %1900 = vrot.lane.b32.xlu0 %v1897, 64
      %v1901 = vpop.permute.xlu0 %1900
      %v1903 = vmul.f32 %v1896, %v1901
      %1905 = vrot.lane.b32.xlu0 %v1903, 32
      %v1906 = vpop.permute.xlu0 %1905
      %v1908 = vadd.f32 %v1898, %v1906
      %v1909 = vtanh.pop %v1908
      %1911 = vrot.lane.b32.xlu0 %v1909, 64
      %v1912 = vpop.permute.xlu0 %1911
      %v1914 = vmul.f32 %v1896, %v1912
      %s1915 = sadd.s32 %s835, 3
      %s1916 = smul.u32 %s1915, 32
      %s1917 = scalar_lea.vmem %s10, %s1916
      %v1918 = vld [vmem:[%s1917] sm:$0xff]
      %v1919 = vld [vmem:[%s1917 + $0x8] sm:$0xff]
      %v1920 = vld [vmem:[%s1917 + $0x10] sm:$0xff]
      %v1921 = vld [vmem:[%s1917 + $0x18] sm:$0xff]
      %1923 = vrot.lane.b32.xlu0 %v1914, 32
      %v1924 = vpop.permute.xlu0 %1923
      %v1925 = vsel %vm842, %v1924, 0
      %1927 = vmatprep.subr.mxu0 0.0
      %1928 = vmatpush1.msra.mxu0 0.0
      %1929 = vmatprep.subr.mxu0 0.0
      %1930 = vmatpush1.msra.mxu0 0.0
      %1931 = vmatprep.subr.mxu0 0.0
      %1932 = vmatpush1.msra.mxu0 0.0
      %1933 = vmatprep.subr.mxu0 0.0
      %1934 = vmatpush1.msra.mxu0 0.0
      %1935 = vmatprep.subr.mxu0 0.0
      %1936 = vmatpush1.msra.mxu0 0.0
      %1937 = vmatprep.subr.mxu0 0.0
      %1938 = vmatpush1.msra.mxu0 0.0
      %1939 = vmatprep.subr.mxu0 0.0
      %1940 = vmatpush1.msra.mxu0 0.0
      %1941 = vmatprep.subr.mxu0 0.0
      %1942 = vmatpush1.msra.mxu0 0.0
      %1943 = vmatprep.subr.mxu0 0.0
      %1944 = vmatpush1.msra.mxu0 0.0
      %1945 = vmatprep.subr.mxu0 0.0
      %1946 = vmatpush1.msra.mxu0 0.0
      %1947 = vmatprep.subr.mxu0 0.0
      %1948 = vmatpush1.msra.mxu0 0.0
      %1949 = vmatprep.subr.mxu0 0.0
      %1950 = vmatpush1.msra.mxu0 0.0
      %1951 = vmatprep.subr.mxu0 0.0
      %1952 = vmatpush1.msra.mxu0 %v1921
      %1953 = vmatprep.subr.mxu0 0.0
      %1954 = vmatpush1.msra.mxu0 %v1920
      %1955 = vmatprep.subr.mxu0 0.0
      %1956 = vmatpush1.msra.mxu0 %v1919
      %1957 = vmatprep.subr.mxu0 0.0
      %1958 = vmatpush1.msra.mxu0 %v1918
      %1959 = vmatprep.subr.mxu0 0.0
      %1960 = vmatpush2.msra.mxu0 0.0
      %1961 = vmatprep.subr.mxu0 0.0
      %1962 = vmatpush2.msra.mxu0 0.0
      %1963 = vmatprep.subr.mxu0 0.0
      %1964 = vmatpush2.msra.mxu0 0.0
      %1965 = vmatprep.subr.mxu0 0.0
      %1966 = vmatpush2.msra.mxu0 0.0
      %1967 = vmatprep.subr.mxu0 0.0
      %1968 = vmatpush2.msra.mxu0 0.0
      %1969 = vmatprep.subr.mxu0 0.0
      %1970 = vmatpush2.msra.mxu0 0.0
      %1971 = vmatprep.subr.mxu0 0.0
      %1972 = vmatpush2.msra.mxu0 0.0
      %1973 = vmatprep.subr.mxu0 0.0
      %1974 = vmatpush2.msra.mxu0 0.0
      %1975 = vmatprep.subr.mxu0 0.0
      %1976 = vmatpush2.msra.mxu0 0.0
      %1977 = vmatprep.subr.mxu0 0.0
      %1978 = vmatpush2.msra.mxu0 0.0
      %1979 = vmatprep.subr.mxu0 0.0
      %1980 = vmatpush2.msra.mxu0 0.0
      %1981 = vmatprep.subr.mxu0 0.0
      %1982 = vmatpush2.msra.mxu0 0.0
      %1983 = vmatprep.subr.mxu0 0.0
      %1984 = vmatpush2.msra.mxu0 0.0
      %1985 = vmatprep.subr.mxu0 0.0
      %1986 = vmatpush2.msra.mxu0 0.0
      %1987 = vmatprep.subr.mxu0 0.0
      %1988 = vmatpush2.msra.mxu0 0.0
      %1989 = vmatprep.subr.mxu0 0.0
      %1990 = vmatpush2.msra.mxu0 0.0
      %1991 = vmatprep.mubr.f32.mxu0 0.0
      %1992 = vmatmul.mubr.f32.gmra.mxu0 %v1925
      %v1993 = vpop.f32.mrf.mxu0
      %v1994 = vadd.f32 0.0, %v1993
      %v1995 = vpop.f32.mrf.mxu0
      %1996 = vdwg.mxu0
      %v1997 = vadd.f32 %v1709, %v1994
    $region78: #{rnn_forward.1} parent=1 // loop_footer
      %s829 = sadd.s32 1, %s825
    $region79: #{rnn_forward.1} parent=1 // loop_footer_branch
      %824 = sbr.rel target = $region75
    $region80: #{rnn_forward.1} parent=1 // loop_exit
      _
    %v1998 = vld [vmem:[%s11] sm:$0x1]
    %v2000 = vlaneseq
    %v2001 = vshrl.u32 %v2000, 7
    %v2002 = vsub.s32 0, %v2001
    %v2003 = vrot.slane %v1998, %v2002
    %v2005 = vadd.f32 %v834, %v2003
    %v2006 = vmax.f32 %v2005, 0.0
    %v2007 = vld [vmem:[%s12] sm:$0xff]
    %v2008 = vld [vmem:[%s12 + $0x8] sm:$0xff]
    %v2009 = vld [vmem:[%s12 + $0x10] sm:$0xff]
    %v2010 = vld [vmem:[%s12 + $0x18] sm:$0xff]
    %v2011 = vld [vmem:[%s12 + $0x20] sm:$0xff]
    %v2012 = vld [vmem:[%s12 + $0x28] sm:$0xff]
    %v2013 = vld [vmem:[%s12 + $0x30] sm:$0xff]
    %v2014 = vld [vmem:[%s12 + $0x38] sm:$0xff]
    %v2015 = vld [vmem:[%s13] sm:$0x1]
    %v2017 = vlaneseq
    %v2018 = vshrl.u32 %v2017, 7
    %v2019 = vsub.s32 0, %v2018
    %v2020 = vrot.slane %v2015, %v2019
    %v2023 = vsel %vm682, %v2006, 0
    %2025 = vmatprep.subr.mxu0 0.0
    %2026 = vmatpush1.msra.mxu0 0.0
    %2027 = vmatprep.subr.mxu0 0.0
    %2028 = vmatpush1.msra.mxu0 0.0
    %2029 = vmatprep.subr.mxu0 0.0
    %2030 = vmatpush1.msra.mxu0 0.0
    %2031 = vmatprep.subr.mxu0 0.0
    %2032 = vmatpush1.msra.mxu0 0.0
    %2033 = vmatprep.subr.mxu0 0.0
    %2034 = vmatpush1.msra.mxu0 0.0
    %2035 = vmatprep.subr.mxu0 0.0
    %2036 = vmatpush1.msra.mxu0 0.0
    %2037 = vmatprep.subr.mxu0 0.0
    %2038 = vmatpush1.msra.mxu0 0.0
    %2039 = vmatprep.subr.mxu0 0.0
    %2040 = vmatpush1.msra.mxu0 0.0
    %2041 = vmatprep.subr.mxu0 0.0
    %2042 = vmatpush1.msra.mxu0 %v2014
    %2043 = vmatprep.subr.mxu0 0.0
    %2044 = vmatpush1.msra.mxu0 %v2013
    %2045 = vmatprep.subr.mxu0 0.0
    %2046 = vmatpush1.msra.mxu0 %v2012
    %2047 = vmatprep.subr.mxu0 0.0
    %2048 = vmatpush1.msra.mxu0 %v2011
    %2049 = vmatprep.subr.mxu0 0.0
    %2050 = vmatpush1.msra.mxu0 %v2010
    %2051 = vmatprep.subr.mxu0 0.0
    %2052 = vmatpush1.msra.mxu0 %v2009
    %2053 = vmatprep.subr.mxu0 0.0
    %2054 = vmatpush1.msra.mxu0 %v2008
    %2055 = vmatprep.subr.mxu0 0.0
    %2056 = vmatpush1.msra.mxu0 %v2007
    %2057 = vmatprep.subr.mxu0 0.0
    %2058 = vmatpush2.msra.mxu0 0.0
    %2059 = vmatprep.subr.mxu0 0.0
    %2060 = vmatpush2.msra.mxu0 0.0
    %2061 = vmatprep.subr.mxu0 0.0
    %2062 = vmatpush2.msra.mxu0 0.0
    %2063 = vmatprep.subr.mxu0 0.0
    %2064 = vmatpush2.msra.mxu0 0.0
    %2065 = vmatprep.subr.mxu0 0.0
    %2066 = vmatpush2.msra.mxu0 0.0
    %2067 = vmatprep.subr.mxu0 0.0
    %2068 = vmatpush2.msra.mxu0 0.0
    %2069 = vmatprep.subr.mxu0 0.0
    %2070 = vmatpush2.msra.mxu0 0.0
    %2071 = vmatprep.subr.mxu0 0.0
    %2072 = vmatpush2.msra.mxu0 0.0
    %2073 = vmatprep.subr.mxu0 0.0
    %2074 = vmatpush2.msra.mxu0 0.0
    %2075 = vmatprep.subr.mxu0 0.0
    %2076 = vmatpush2.msra.mxu0 0.0
    %2077 = vmatprep.subr.mxu0 0.0
    %2078 = vmatpush2.msra.mxu0 0.0
    %2079 = vmatprep.subr.mxu0 0.0
    %2080 = vmatpush2.msra.mxu0 0.0
    %2081 = vmatprep.subr.mxu0 0.0
    %2082 = vmatpush2.msra.mxu0 0.0
    %2083 = vmatprep.subr.mxu0 0.0
    %2084 = vmatpush2.msra.mxu0 0.0
    %2085 = vmatprep.subr.mxu0 0.0
    %2086 = vmatpush2.msra.mxu0 0.0
    %2087 = vmatprep.subr.mxu0 0.0
    %2088 = vmatpush2.msra.mxu0 0.0
    %2089 = vmatprep.mubr.f32.mxu0 0.0
    %2090 = vmatmul.mubr.f32.gmra.mxu0 %v2023
    %v2091 = vpop.f32.mrf.mxu0
    %v2092 = vadd.f32 %v2020, %v2091
    %v2093 = vpop.f32.mrf.mxu0
    %2094 = vdwg.mxu0
    %v2095 = vmax.f32 %v2092, 0.0
    %v2096 = vld [vmem:[%s14] sm:$0xff]
    %v2097 = vld [vmem:[%s14 + $0x8] sm:$0xff]
    %v2098 = vld [vmem:[%s14 + $0x10] sm:$0xff]
    %v2099 = vld [vmem:[%s14 + $0x18] sm:$0xff]
    %v2100 = vld [vmem:[#allocation3] sm:$0x1]
    %v2102 = vlaneseq
    %v2103 = vshrl.u32 %v2102, 7
    %v2104 = vsub.s32 0, %v2103
    %v2105 = vrot.slane %v2100, %v2104
    %vm2107 = vcmask 261120
    %v2109 = vsel %vm2107, %v2095, 0
    %2111 = vmatprep.subr.mxu0 0.0
    %2112 = vmatpush1.msra.mxu0 0.0
    %2113 = vmatprep.subr.mxu0 0.0
    %2114 = vmatpush1.msra.mxu0 0.0
    %2115 = vmatprep.subr.mxu0 0.0
    %2116 = vmatpush1.msra.mxu0 0.0
    %2117 = vmatprep.subr.mxu0 0.0
    %2118 = vmatpush1.msra.mxu0 0.0
    %2119 = vmatprep.subr.mxu0 0.0
    %2120 = vmatpush1.msra.mxu0 0.0
    %2121 = vmatprep.subr.mxu0 0.0
    %2122 = vmatpush1.msra.mxu0 0.0
    %2123 = vmatprep.subr.mxu0 0.0
    %2124 = vmatpush1.msra.mxu0 0.0
    %2125 = vmatprep.subr.mxu0 0.0
    %2126 = vmatpush1.msra.mxu0 0.0
    %2127 = vmatprep.subr.mxu0 0.0
    %2128 = vmatpush1.msra.mxu0 0.0
    %2129 = vmatprep.subr.mxu0 0.0
    %2130 = vmatpush1.msra.mxu0 0.0
    %2131 = vmatprep.subr.mxu0 0.0
    %2132 = vmatpush1.msra.mxu0 0.0
    %2133 = vmatprep.subr.mxu0 0.0
    %2134 = vmatpush1.msra.mxu0 0.0
    %2135 = vmatprep.subr.mxu0 0.0
    %2136 = vmatpush1.msra.mxu0 %v2099
    %2137 = vmatprep.subr.mxu0 0.0
    %2138 = vmatpush1.msra.mxu0 %v2098
    %2139 = vmatprep.subr.mxu0 0.0
    %2140 = vmatpush1.msra.mxu0 %v2097
    %2141 = vmatprep.subr.mxu0 0.0
    %2142 = vmatpush1.msra.mxu0 %v2096
    %2143 = vmatprep.subr.mxu0 0.0
    %2144 = vmatpush2.msra.mxu0 0.0
    %2145 = vmatprep.subr.mxu0 0.0
    %2146 = vmatpush2.msra.mxu0 0.0
    %2147 = vmatprep.subr.mxu0 0.0
    %2148 = vmatpush2.msra.mxu0 0.0
    %2149 = vmatprep.subr.mxu0 0.0
    %2150 = vmatpush2.msra.mxu0 0.0
    %2151 = vmatprep.subr.mxu0 0.0
    %2152 = vmatpush2.msra.mxu0 0.0
    %2153 = vmatprep.subr.mxu0 0.0
    %2154 = vmatpush2.msra.mxu0 0.0
    %2155 = vmatprep.subr.mxu0 0.0
    %2156 = vmatpush2.msra.mxu0 0.0
    %2157 = vmatprep.subr.mxu0 0.0
    %2158 = vmatpush2.msra.mxu0 0.0
    %2159 = vmatprep.subr.mxu0 0.0
    %2160 = vmatpush2.msra.mxu0 0.0
    %2161 = vmatprep.subr.mxu0 0.0
    %2162 = vmatpush2.msra.mxu0 0.0
    %2163 = vmatprep.subr.mxu0 0.0
    %2164 = vmatpush2.msra.mxu0 0.0
    %2165 = vmatprep.subr.mxu0 0.0
    %2166 = vmatpush2.msra.mxu0 0.0
    %2167 = vmatprep.subr.mxu0 0.0
    %2168 = vmatpush2.msra.mxu0 0.0
    %2169 = vmatprep.subr.mxu0 0.0
    %2170 = vmatpush2.msra.mxu0 0.0
    %2171 = vmatprep.subr.mxu0 0.0
    %2172 = vmatpush2.msra.mxu0 0.0
    %2173 = vmatprep.subr.mxu0 0.0
    %2174 = vmatpush2.msra.mxu0 0.0
    %2175 = vmatprep.mubr.f32.mxu0 0.0
    %2176 = vmatmul.mubr.f32.gmra.mxu0 %v2109
    %v2177 = vpop.f32.mrf.mxu0
    %v2178 = vadd.f32 %v2105, %v2177
    %v2179 = vpop.f32.mrf.mxu0
    %2180 = vdwg.mxu0
    %vm2181 = vcmask 1024
    %2182 = vst.msk [vmem:[%s16] sm:$0x3] %vm2181, %v2178
    // Predicated region
    $region81: #{rnn_forward.1} parent=1 // pred_check
      _
    $region82: #{rnn_forward.1} parent=1 // pred_check_branch
      %2184 = sbr.rel (0) target = $region84
    $region83: #{rnn_forward.1} parent=1 // pred_region
      _
    $region84: #{rnn_forward.1} parent=1 // pred_fallthru
      _
    // Predicated region
    $region85: #{rnn_forward.1} parent=1 // pred_check
      _
    $region86: #{rnn_forward.1} parent=1 // pred_check_branch
      %2186 = sbr.rel (0) target = $region88
    $region87: #{rnn_forward.1} parent=1 // pred_region
      _
    $region88: #{rnn_forward.1} parent=1 // pred_fallthru
      _
    %2187 = vsyncpa [#allocation5], 1
    %2188 = vsyncpa [#allocation7], 1

</llo_original>
